<compile_context>
chip_gen: v7x
topology: tpu7x:2x2x1
jax: 0.10.0
libtpu: 0.0.40
codegen_flags: <defaults>
</compile_context>

<pallas_src>
import math

import jax
import jax.numpy as jnp
from jax.experimental import pallas as pl
from jax.experimental.pallas import tpu as pltpu

EPS = 1e-5  # torch.nn.LayerNorm default eps


def _round_up(x, m):
    return ((x + m - 1) // m) * m


def _ffn_kernel(x_ref, w1_ref, w2_ref, g_ref, b_ref, o_ref):
    """Fused up-proj -> ReLU -> down-proj -> residual -> LayerNorm on one row tile.

    x_ref : (tm, E)  activation row tile (input dtype)
    w1_ref: (E, F)   bf16 up-proj weight (resident in VMEM)
    w2_ref: (F, E)   bf16 down-proj weight (resident in VMEM)
    g_ref : (1, E)   f32 LayerNorm gamma
    b_ref : (1, E)   f32 LayerNorm beta
    o_ref : (tm, E)  output row tile (input dtype)
    """
    x_f32 = x_ref[...].astype(jnp.float32)      # residual / LayerNorm path in f32
    x_mm = x_ref[...].astype(jnp.bfloat16)      # MXU path in bf16

    # Linear(E->F, no bias) + ReLU  -- bf16 MXU matmul, f32 accumulate.
    h = jnp.maximum(
        jnp.dot(x_mm, w1_ref[...], preferred_element_type=jnp.float32), 0.0)

    # Linear(F->E, no bias) + residual -- bf16 MXU matmul, f32 accumulate.
    y = jnp.dot(h.astype(jnp.bfloat16), w2_ref[...],
                preferred_element_type=jnp.float32) + x_f32

    # LayerNorm over the trailing lane dim E (biased variance, eps=1e-5).
    # var = E[y^2] - mean^2: the two cross-lane reductions are independent.
    mean = jnp.mean(y, axis=-1, keepdims=True)
    msq = jnp.mean(y * y, axis=-1, keepdims=True)
    var = jnp.maximum(msq - mean * mean, 0.0)
    out = (y - mean) * jax.lax.rsqrt(var + EPS) * g_ref[...] + b_ref[...]
    o_ref[...] = out.astype(o_ref.dtype)


def prepare_feedforward_params(w1, w2, gamma, beta, *, matmul_dtype=jnp.bfloat16):
    """One-time parameter prep (hoisted out of the per-call forward).

    w1:    (F, E) torch weight of nn.Linear(E, F, bias=False)  (y = x @ w1.T)
    w2:    (E, F) torch weight of nn.Linear(F, E, bias=False)
    gamma: (E,)   LayerNorm weight
    beta:  (E,)   LayerNorm bias
    """
    F_dim, E = int(w1.shape[0]), int(w1.shape[1])
    del F_dim
    return {
        "w1t": jnp.asarray(w1, jnp.float32).T.astype(matmul_dtype),  # (E, F)
        "w2t": jnp.asarray(w2, jnp.float32).T.astype(matmul_dtype),  # (F, E)
        "gamma": jnp.asarray(gamma, jnp.float32).reshape(1, E),
        "beta": jnp.asarray(beta, jnp.float32).reshape(1, E),
    }


def _default_block_rows(M):
    if M <= 256:
        return _round_up(max(M, 1), 8)
    # >= 2 row tiles so the "parallel" axis can shard over v7x's two TensorCores;
    # 256-row multiples match the v6e/v7x 256x256 MXU (v5e is fine with that too).
    return min(512, _round_up(pl.cdiv(M, 2), 256))


def feedforward_forward(x, params, *, block_rows=None):
    """Pallas forward of the torch `feedforward` module. x: (..., E)."""
    orig_shape = x.shape
    E = int(orig_shape[-1])
    M = int(math.prod(orig_shape[:-1])) if len(orig_shape) > 1 else 1

    w1t = params["w1t"]      # (E, F) bf16
    w2t = params["w2t"]      # (F, E) bf16
    gamma = params["gamma"]  # (1, E) f32
    beta = params["beta"]    # (1, E) f32
    F_dim = int(w1t.shape[1])

    x2 = x.reshape(M, E)     # keep input dtype: no forced activation upcast
    if block_rows is None:
        block_rows = _default_block_rows(M)
    n_blocks = pl.cdiv(M, block_rows)
    m_pad = n_blocks * block_rows
    if m_pad != M:
        x2 = jnp.pad(x2, ((0, m_pad - M), (0, 0)))

    out_dtype = x.dtype
    itemsize_x = jnp.dtype(x2.dtype).itemsize
    itemsize_o = jnp.dtype(out_dtype).itemsize
    w_bytes = (w1t.size * w1t.dtype.itemsize + w2t.size * w2t.dtype.itemsize)

    # VMEM budget: double-buffered activation/output tiles + resident weights
    # (counted x2 to also cover the fallback double-buffered path) + f32
    # intermediates, with ~20% headroom.
    need = (2 * block_rows * E * itemsize_x
            + 2 * block_rows * E * itemsize_o
            + 2 * w_bytes
            + block_rows * F_dim * 4          # h intermediate
            + 3 * block_rows * E * 4          # f32 temps (x_f32, y, out)
            + 2 * E * 4)                      # gamma/beta
    vmem_limit = int(min(max(int(need * 1.2) + (2 << 20), 16 << 20), 100 << 20))

    cost = pl.CostEstimate(
        flops=4 * m_pad * E * F_dim + 10 * m_pad * E,
        transcendentals=m_pad,
        bytes_accessed=(m_pad * E * (itemsize_x + itemsize_o)
                        + w_bytes + 2 * E * 4),
    )

    def make_call(single_buffer_weights):
        wkw = ({"pipeline_mode": pl.Buffered(1)} if single_buffer_weights else {})
        return pl.pallas_call(
            _ffn_kernel,
            out_shape=jax.ShapeDtypeStruct((m_pad, E), out_dtype),
            grid_spec=pltpu.PrefetchScalarGridSpec(
                num_scalar_prefetch=0,
                grid=(n_blocks,),
                in_specs=[
                    pl.BlockSpec((block_rows, E), lambda i: (i, 0)),        # x rows
                    pl.BlockSpec((E, F_dim), lambda i: (0, 0), **wkw),      # W1^T
                    pl.BlockSpec((F_dim, E), lambda i: (0, 0), **wkw),      # W2^T
                    pl.BlockSpec((1, E), lambda i: (0, 0), **wkw),          # gamma
                    pl.BlockSpec((1, E), lambda i: (0, 0), **wkw),          # beta
                ],
                out_specs=pl.BlockSpec((block_rows, E), lambda i: (i, 0)),
            ),
            compiler_params=pltpu.CompilerParams(
                dimension_semantics=("parallel",),
                vmem_limit_bytes=vmem_limit),
            cost_estimate=cost,
        )

    # Grid-invariant operands want single buffering (halves their VMEM cost).
    # Fall back to default pipelining if pl.Buffered(1) is rejected by this jax.
    try:
        out = make_call(True)(x2, w1t, w2t, gamma, beta)
    except Exception:
        out = make_call(False)(x2, w1t, w2t, gamma, beta)

    if m_pad != M:
        out = out[:M]
    return out.reshape(orig_shape)


def feedforward_reference(x, w1, w2, gamma, beta):
    """Pure-JAX f32 reference with identical semantics (for verification)."""
    x = x.astype(jnp.float32)
    h = jnp.maximum(x @ jnp.asarray(w1, jnp.float32).T, 0.0)
    o = h @ jnp.asarray(w2, jnp.float32).T
    y = o + x
    mean = jnp.mean(y, axis=-1, keepdims=True)
    var = jnp.mean((y - mean) ** 2, axis=-1, keepdims=True)
    return (y - mean) / jnp.sqrt(var + EPS) * gamma + beta


if __name__ == "__main__":
    batch, seq = 2, 64
    embedding_dimension, feature_dimension = 128, 256

    key = jax.random.PRNGKey(0)
    kx, k1, k2, kg, kb, kx2 = jax.random.split(key, 6)
    x = jax.random.normal(kx, (batch, seq, embedding_dimension), dtype=jnp.float32)
    w1 = jax.random.normal(
        k1, (feature_dimension, embedding_dimension), dtype=jnp.float32) * 0.05
    w2 = jax.random.normal(
        k2, (embedding_dimension, feature_dimension), dtype=jnp.float32) * 0.05
    gamma = 1.0 + 0.1 * jax.random.normal(kg, (embedding_dimension,), dtype=jnp.float32)
    beta = 0.1 * jax.random.normal(kb, (embedding_dimension,), dtype=jnp.float32)

    # One-time parameter prep (transpose + bf16 cast hoisted out of the forward).
    params = prepare_feedforward_params(w1, w2, gamma, beta)

    out = jax.block_until_ready(feedforward_forward(x, params))
    ref = feedforward_reference(x, w1, w2, gamma, beta)
    assert out.shape == x.shape, out.shape
    err = float(jnp.max(jnp.abs(out.astype(jnp.float32) - ref)))
    assert err < 2e-2, err   # bf16 MXU matmuls with f32 accumulation/epilogue

    # Second check: non-divisible M (padding path) + multi-tile "parallel" grid.
    x_b = jax.random.normal(kx2, (3, 100, embedding_dimension), dtype=jnp.float32)
    out_b = jax.block_until_ready(feedforward_forward(x_b, params))
    ref_b = feedforward_reference(x_b, w1, w2, gamma, beta)
    assert out_b.shape == x_b.shape, out_b.shape
    err_b = float(jnp.max(jnp.abs(out_b.astype(jnp.float32) - ref_b)))
    assert err_b < 2e-2, err_b

    print("KERNEL_OK")
</pallas_src>

<mosaic_0001>
module attributes {stable_mosaic.version = 11 : i64} {
  func.func @_ffn_kernel(%arg0: i32, %arg1: memref<128x128xf32, #tpu.memory_space<vmem>>, %arg2: memref<128x256xbf16, #tpu.memory_space<vmem>>, %arg3: memref<256x128xbf16, #tpu.memory_space<vmem>>, %arg4: memref<1x128xf32, #tpu.memory_space<vmem>>, %arg5: memref<1x128xf32, #tpu.memory_space<vmem>>, %arg6: memref<128x128xf32, #tpu.memory_space<vmem>>) attributes {dimension_semantics = [#tpu.dimension_semantics<parallel>], iteration_bounds = array<i64: 1>, scalar_prefetch = 0 : i64, scratch_operands = 0 : i64, tpu.core_type = #tpu.core_type<tc>, window_params = [{transform_indices = @transform_0, window_bounds = array<i64: 128, 128>}, {pipeline_mode = #tpu.pipeline_mode<synchronous>, transform_indices = @transform_1, window_bounds = array<i64: 128, 256>}, {pipeline_mode = #tpu.pipeline_mode<synchronous>, transform_indices = @transform_2, window_bounds = array<i64: 256, 128>}, {pipeline_mode = #tpu.pipeline_mode<synchronous>, transform_indices = @transform_3, window_bounds = array<i64: 1, 128>}, {pipeline_mode = #tpu.pipeline_mode<synchronous>, transform_indices = @transform_4, window_bounds = array<i64: 1, 128>}, {transform_indices = @transform_5, window_bounds = array<i64: 128, 128>}]} {
    %c0 = arith.constant 0 : index
    %c0_0 = arith.constant 0 : index
    %0 = vector.load %arg1[%c0, %c0_0] : memref<128x128xf32, #tpu.memory_space<vmem>>, vector<128x128xf32>
    %c0_1 = arith.constant 0 : index
    %c0_2 = arith.constant 0 : index
    %1 = vector.load %arg1[%c0_1, %c0_2] : memref<128x128xf32, #tpu.memory_space<vmem>>, vector<128x128xf32>
    %2 = arith.truncf %1 : vector<128x128xf32> to vector<128x128xbf16>
    %c0_3 = arith.constant 0 : index
    %c0_4 = arith.constant 0 : index
    %3 = vector.load %arg2[%c0_3, %c0_4] : memref<128x256xbf16, #tpu.memory_space<vmem>>, vector<128x256xbf16>
    %cst = arith.constant dense<0.000000e+00> : vector<128x256xf32>
    %4 = tpu.matmul %2, %3, %cst {dimension_numbers = #tpu.dot_dimension_numbers<[1], [0], [0], [1], [0, 0, 1, 1], [], []>} : vector<128x128xbf16>, vector<128x256xbf16>, vector<128x256xf32> -> vector<128x256xf32>
    %cst_5 = arith.constant 0.000000e+00 : f32
    %5 = vector.broadcast %cst_5 : f32 to vector<128x256xf32>
    %6 = arith.maximumf %4, %5 : vector<128x256xf32>
    %7 = arith.truncf %6 : vector<128x256xf32> to vector<128x256xbf16>
    %c0_6 = arith.constant 0 : index
    %c0_7 = arith.constant 0 : index
    %8 = vector.load %arg3[%c0_6, %c0_7] : memref<256x128xbf16, #tpu.memory_space<vmem>>, vector<256x128xbf16>
    %cst_8 = arith.constant dense<0.000000e+00> : vector<128x128xf32>
    %9 = tpu.matmul %7, %8, %cst_8 {dimension_numbers = #tpu.dot_dimension_numbers<[1], [0], [0], [1], [0, 0, 1, 1], [], []>} : vector<128x256xbf16>, vector<256x128xbf16>, vector<128x128xf32> -> vector<128x128xf32>
    %10 = arith.addf %9, %0 : vector<128x128xf32>
    %cst_9 = arith.constant dense<0.000000e+00> : vector<128xf32>
    %11 = vector.multi_reduction <add>, %10, %cst_9 [1] : vector<128x128xf32> to vector<128xf32>
    %12 = vector.shape_cast %11 : vector<128xf32> to vector<128x1xf32>
    %cst_10 = arith.constant 1.280000e+02 : f32
    %13 = vector.broadcast %cst_10 : f32 to vector<128x1xf32>
    %14 = arith.divf %12, %13 : vector<128x1xf32>
    %15 = arith.mulf %10, %10 : vector<128x128xf32>
    %cst_11 = arith.constant dense<0.000000e+00> : vector<128xf32>
    %16 = vector.multi_reduction <add>, %15, %cst_11 [1] : vector<128x128xf32> to vector<128xf32>
    %17 = vector.shape_cast %16 : vector<128xf32> to vector<128x1xf32>
    %cst_12 = arith.constant 1.280000e+02 : f32
    %18 = vector.broadcast %cst_12 : f32 to vector<128x1xf32>
    %19 = arith.divf %17, %18 : vector<128x1xf32>
    %20 = arith.mulf %14, %14 : vector<128x1xf32>
    %21 = arith.subf %19, %20 : vector<128x1xf32>
    %cst_13 = arith.constant 0.000000e+00 : f32
    %22 = vector.broadcast %cst_13 : f32 to vector<128x1xf32>
    %23 = arith.maximumf %21, %22 : vector<128x1xf32>
    %24 = vector.broadcast %14 : vector<128x1xf32> to vector<128x128xf32>
    %25 = arith.subf %10, %24 : vector<128x128xf32>
    %cst_14 = arith.constant 9.99999974E-6 : f32
    %26 = vector.broadcast %cst_14 : f32 to vector<128x1xf32>
    %27 = arith.addf %23, %26 : vector<128x1xf32>
    %28 = math.rsqrt %27 : vector<128x1xf32>
    %29 = vector.broadcast %28 : vector<128x1xf32> to vector<128x128xf32>
    %30 = arith.mulf %25, %29 : vector<128x128xf32>
    %c0_15 = arith.constant 0 : index
    %c0_16 = arith.constant 0 : index
    %31 = vector.load %arg4[%c0_15, %c0_16] : memref<1x128xf32, #tpu.memory_space<vmem>>, vector<1x128xf32>
    %32 = vector.broadcast %31 : vector<1x128xf32> to vector<128x128xf32>
    %33 = arith.mulf %30, %32 : vector<128x128xf32>
    %c0_17 = arith.constant 0 : index
    %c0_18 = arith.constant 0 : index
    %34 = vector.load %arg5[%c0_17, %c0_18] : memref<1x128xf32, #tpu.memory_space<vmem>>, vector<1x128xf32>
    %35 = vector.broadcast %34 : vector<1x128xf32> to vector<128x128xf32>
    %36 = arith.addf %33, %35 : vector<128x128xf32>
    %c0_19 = arith.constant 0 : index
    %c0_20 = arith.constant 0 : index
    %37 = vector.load %arg6[%c0_19, %c0_20] : memref<128x128xf32, #tpu.memory_space<vmem>>, vector<128x128xf32>
    tpu.vector_store %arg6[%c0_19, %c0_20], %36 {strides = array<i32>} : memref<128x128xf32, #tpu.memory_space<vmem>>, vector<128x128xf32>,
    return
  }
  func.func @transform_0(%arg0: i32) -> (i32, i32) {
    %c0_i32 = arith.constant 0 : i32
    %c0_i32_0 = arith.constant 0 : i32
    return %arg0, %c0_i32 : i32, i32
  }
  func.func @transform_1(%arg0: i32) -> (i32, i32) {
    %c0_i32 = arith.constant 0 : i32
    %c0_i32_0 = arith.constant 0 : i32
    %c0_i32_1 = arith.constant 0 : i32
    return %c0_i32, %c0_i32_0 : i32, i32
  }
  func.func @transform_2(%arg0: i32) -> (i32, i32) {
    %c0_i32 = arith.constant 0 : i32
    %c0_i32_0 = arith.constant 0 : i32
    %c0_i32_1 = arith.constant 0 : i32
    return %c0_i32, %c0_i32_0 : i32, i32
  }
  func.func @transform_3(%arg0: i32) -> (i32, i32) {
    %c0_i32 = arith.constant 0 : i32
    %c0_i32_0 = arith.constant 0 : i32
    %c0_i32_1 = arith.constant 0 : i32
    return %c0_i32, %c0_i32_0 : i32, i32
  }
  func.func @transform_4(%arg0: i32) -> (i32, i32) {
    %c0_i32 = arith.constant 0 : i32
    %c0_i32_0 = arith.constant 0 : i32
    %c0_i32_1 = arith.constant 0 : i32
    return %c0_i32, %c0_i32_0 : i32, i32
  }
  func.func @transform_5(%arg0: i32) -> (i32, i32) {
    %c0_i32 = arith.constant 0 : i32
    %c0_i32_0 = arith.constant 0 : i32
    return %arg0, %c0_i32 : i32, i32
  }
}

module attributes {stable_mosaic.version = 11 : i64} {
  func.func @_ffn_kernel(%arg0: i32, %arg1: memref<128x128xf32, #tpu.memory_space<vmem>>, %arg2: memref<128x256xbf16, #tpu.memory_space<vmem>>, %arg3: memref<256x128xbf16, #tpu.memory_space<vmem>>, %arg4: memref<1x128xf32, #tpu.memory_space<vmem>>, %arg5: memref<1x128xf32, #tpu.memory_space<vmem>>, %arg6: memref<128x128xf32, #tpu.memory_space<vmem>>) attributes {dimension_semantics = [#tpu.dimension_semantics<parallel>], iteration_bounds = array<i64: 1>, scalar_prefetch = 0 : i64, scratch_operands = 0 : i64, tpu.core_type = #tpu.core_type<tc>, window_params = [{transform_indices = @transform_0, window_bounds = array<i64: 128, 128>}, {pipeline_mode = #tpu.pipeline_mode<synchronous>, transform_indices = @transform_1, window_bounds = array<i64: 128, 256>}, {pipeline_mode = #tpu.pipeline_mode<synchronous>, transform_indices = @transform_2, window_bounds = array<i64: 256, 128>}, {pipeline_mode = #tpu.pipeline_mode<synchronous>, transform_indices = @transform_3, window_bounds = array<i64: 1, 128>}, {pipeline_mode = #tpu.pipeline_mode<synchronous>, transform_indices = @transform_4, window_bounds = array<i64: 1, 128>}, {transform_indices = @transform_5, window_bounds = array<i64: 128, 128>}]} {
    %c0 = arith.constant 0 : index
    %c0_0 = arith.constant 0 : index
    %0 = vector.load %arg1[%c0, %c0_0] : memref<128x128xf32, #tpu.memory_space<vmem>>, vector<128x128xf32>
    %c0_1 = arith.constant 0 : index
    %c0_2 = arith.constant 0 : index
    %1 = vector.load %arg1[%c0_1, %c0_2] : memref<128x128xf32, #tpu.memory_space<vmem>>, vector<128x128xf32>
    %2 = arith.truncf %1 : vector<128x128xf32> to vector<128x128xbf16>
    %c0_3 = arith.constant 0 : index
    %c0_4 = arith.constant 0 : index
    %3 = vector.load %arg2[%c0_3, %c0_4] : memref<128x256xbf16, #tpu.memory_space<vmem>>, vector<128x256xbf16>
    %cst = arith.constant dense<0.000000e+00> : vector<128x256xf32>
    %4 = tpu.matmul %2, %3, %cst {dimension_numbers = #tpu.dot_dimension_numbers<[1], [0], [0], [1], [0, 0, 1, 1], [], []>} : vector<128x128xbf16>, vector<128x256xbf16>, vector<128x256xf32> -> vector<128x256xf32>
    %cst_5 = arith.constant 0.000000e+00 : f32
    %5 = vector.broadcast %cst_5 : f32 to vector<128x256xf32>
    %6 = arith.maximumf %4, %5 : vector<128x256xf32>
    %7 = arith.truncf %6 : vector<128x256xf32> to vector<128x256xbf16>
    %c0_6 = arith.constant 0 : index
    %c0_7 = arith.constant 0 : index
    %8 = vector.load %arg3[%c0_6, %c0_7] : memref<256x128xbf16, #tpu.memory_space<vmem>>, vector<256x128xbf16>
    %cst_8 = arith.constant dense<0.000000e+00> : vector<128x128xf32>
    %9 = tpu.matmul %7, %8, %cst_8 {dimension_numbers = #tpu.dot_dimension_numbers<[1], [0], [0], [1], [0, 0, 1, 1], [], []>} : vector<128x256xbf16>, vector<256x128xbf16>, vector<128x128xf32> -> vector<128x128xf32>
    %10 = arith.addf %9, %0 : vector<128x128xf32>
    %cst_9 = arith.constant dense<0.000000e+00> : vector<128xf32>
    %11 = vector.multi_reduction <add>, %10, %cst_9 [1] : vector<128x128xf32> to vector<128xf32>
    %12 = vector.shape_cast %11 : vector<128xf32> to vector<128x1xf32>
    %cst_10 = arith.constant 1.280000e+02 : f32
    %13 = vector.broadcast %cst_10 : f32 to vector<128x1xf32>
    %14 = arith.divf %12, %13 : vector<128x1xf32>
    %15 = arith.mulf %10, %10 : vector<128x128xf32>
    %cst_11 = arith.constant dense<0.000000e+00> : vector<128xf32>
    %16 = vector.multi_reduction <add>, %15, %cst_11 [1] : vector<128x128xf32> to vector<128xf32>
    %17 = vector.shape_cast %16 : vector<128xf32> to vector<128x1xf32>
    %cst_12 = arith.constant 1.280000e+02 : f32
    %18 = vector.broadcast %cst_12 : f32 to vector<128x1xf32>
    %19 = arith.divf %17, %18 : vector<128x1xf32>
    %20 = arith.mulf %14, %14 : vector<128x1xf32>
    %21 = arith.subf %19, %20 : vector<128x1xf32>
    %cst_13 = arith.constant 0.000000e+00 : f32
    %22 = vector.broadcast %cst_13 : f32 to vector<128x1xf32>
    %23 = arith.maximumf %21, %22 : vector<128x1xf32>
    %24 = vector.broadcast %14 : vector<128x1xf32> to vector<128x128xf32>
    %25 = arith.subf %10, %24 : vector<128x128xf32>
    %cst_14 = arith.constant 9.99999974E-6 : f32
    %26 = vector.broadcast %cst_14 : f32 to vector<128x1xf32>
    %27 = arith.addf %23, %26 : vector<128x1xf32>
    %28 = math.rsqrt %27 : vector<128x1xf32>
    %29 = vector.broadcast %28 : vector<128x1xf32> to vector<128x128xf32>
    %30 = arith.mulf %25, %29 : vector<128x128xf32>
    %c0_15 = arith.constant 0 : index
    %c0_16 = arith.constant 0 : index
    %31 = vector.load %arg4[%c0_15, %c0_16] : memref<1x128xf32, #tpu.memory_space<vmem>>, vector<1x128xf32>
    %32 = vector.broadcast %31 : vector<1x128xf32> to vector<128x128xf32>
    %33 = arith.mulf %30, %32 : vector<128x128xf32>
    %c0_17 = arith.constant 0 : index
    %c0_18 = arith.constant 0 : index
    %34 = vector.load %arg5[%c0_17, %c0_18] : memref<1x128xf32, #tpu.memory_space<vmem>>, vector<1x128xf32>
    %35 = vector.broadcast %34 : vector<1x128xf32> to vector<128x128xf32>
    %36 = arith.addf %33, %35 : vector<128x128xf32>
    %c0_19 = arith.constant 0 : index
    %c0_20 = arith.constant 0 : index
    %37 = vector.load %arg6[%c0_19, %c0_20] : memref<128x128xf32, #tpu.memory_space<vmem>>, vector<128x128xf32>
    tpu.vector_store %arg6[%c0_19, %c0_20], %36 {strides = array<i32>} : memref<128x128xf32, #tpu.memory_space<vmem>>, vector<128x128xf32>,
    return
  }
  func.func @transform_0(%arg0: i32) -> (i32, i32) {
    %c0_i32 = arith.constant 0 : i32
    %c0_i32_0 = arith.constant 0 : i32
    return %arg0, %c0_i32 : i32, i32
  }
  func.func @transform_1(%arg0: i32) -> (i32, i32) {
    %c0_i32 = arith.constant 0 : i32
    %c0_i32_0 = arith.constant 0 : i32
    %c0_i32_1 = arith.constant 0 : i32
    return %c0_i32, %c0_i32_0 : i32, i32
  }
  func.func @transform_2(%arg0: i32) -> (i32, i32) {
    %c0_i32 = arith.constant 0 : i32
    %c0_i32_0 = arith.constant 0 : i32
    %c0_i32_1 = arith.constant 0 : i32
    return %c0_i32, %c0_i32_0 : i32, i32
  }
  func.func @transform_3(%arg0: i32) -> (i32, i32) {
    %c0_i32 = arith.constant 0 : i32
    %c0_i32_0 = arith.constant 0 : i32
    %c0_i32_1 = arith.constant 0 : i32
    return %c0_i32, %c0_i32_0 : i32, i32
  }
  func.func @transform_4(%arg0: i32) -> (i32, i32) {
    %c0_i32 = arith.constant 0 : i32
    %c0_i32_0 = arith.constant 0 : i32
    %c0_i32_1 = arith.constant 0 : i32
    return %c0_i32, %c0_i32_0 : i32, i32
  }
  func.func @transform_5(%arg0: i32) -> (i32, i32) {
    %c0_i32 = arith.constant 0 : i32
    %c0_i32_0 = arith.constant 0 : i32
    return %arg0, %c0_i32 : i32, i32
  }
}

</mosaic_0001>

<llo_original>
// kernel: tpu_custom_call.1
$region0: #{tpu_custom_call.1}
  #allocation0 [shape = 'u32[]', space=smem, size = 0x4, offset = 0x4, fixed_abs, tag = 'smem constant byte address 0x4 - core index']
  #allocation1 [shape = 'u32[144,128]{1,0:T(1,128)}', space=vmem, size = 0x12000, scoped, tag = 'internal scratch']
  %s0 = inlined_call_operand.hbm [shape: f32[128,128], index: 0, kind: input, shape index: {}]
  %s1 = inlined_call_operand.hbm [shape: bf16[128,256], index: 1, kind: input, shape index: {}]
  %s2 = inlined_call_operand.hbm [shape: bf16[256,128], index: 2, kind: input, shape index: {}]
  %s3 = inlined_call_operand.vmem [shape: f32[1,128], index: 3, kind: input, shape index: {}]
  %s4 = inlined_call_operand.vmem [shape: f32[1,128], index: 4, kind: input, shape index: {}]
  %s5 = inlined_call_operand.hbm [shape: f32[128,128], index: 5, kind: output, shape index: {}]
  %s6 = sld [smem:[#allocation0]]
  $region42: #{tpu_custom_call.1} parent=0
    _
  %s8 = ssub.s32 1, %s6
  %s9 = scalar_select 0, %s8, %s6
  $region1: #{tpu_custom_call.1} parent=0
    #allocation2 [shape = 'u8[65536]{0}', space=vmem, size = 0x10000, scoped, tag = 'input window, operand 0, single buffered']
    #allocation3 [shape = 's32[1]{0}', space=sflag, size = 0x4, scoped, tag = 'scoped memory for tpu_custom_call.1']
    #allocation4 [shape = 's32[1]{0}', space=sflag, size = 0x4, scoped, tag = 'scoped memory for tpu_custom_call.1']
    #allocation5 [shape = 'u8[65536]{0}', space=vmem, size = 0x10000, scoped, tag = 'input window, operand 1, single buffered']
    #allocation6 [shape = 's32[1]{0}', space=sflag, size = 0x4, scoped, tag = 'scoped memory for tpu_custom_call.1']
    #allocation7 [shape = 'u8[65536]{0}', space=vmem, size = 0x10000, scoped, tag = 'input window, operand 2, single buffered']
    #allocation8 [shape = 'u8[65536]{0}', space=vmem, size = 0x10000, scoped, tag = 'output window, operand 0, single buffered']
    %10 = vsyncpa [#allocation3], 0
    %11 = vsyncpa [#allocation6], 0
    %12 = vsyncpa [#allocation4], 0
    // Predicated region
    $region2: #{tpu_custom_call.1} parent=1 // pred_check
      _
    $region3: #{tpu_custom_call.1} parent=1 // pred_check_branch
      %14 = sbr.rel (0) target = $region5
    $region4: #{tpu_custom_call.1} parent=1 // pred_region
      %s16 = ssub.s32 2048, 2048
      %17 = vsyncadd [#allocation3], %s16
      %s18 = sshll.u32 [#allocation2], 4
      %s19 = int_to_ptr.vmem [resolvable:$true] %s18
      %24 = dma.hbm_to_vmem [thread:$0]  %s0, 2048, %s19, [#allocation3], 128, 128, 8
    $region5: #{tpu_custom_call.1} parent=1 // pred_fallthru
      _
    // Predicated region
    $region6: #{tpu_custom_call.1} parent=1 // pred_check
      _
    $region7: #{tpu_custom_call.1} parent=1 // pred_check_branch
      %26 = sbr.rel (0) target = $region9
    $region8: #{tpu_custom_call.1} parent=1 // pred_region
      %s28 = ssub.s32 2048, 2048
      %29 = vsyncadd [#allocation6], %s28
      %s30 = sshll.u32 [#allocation5], 4
      %s31 = int_to_ptr.vmem [resolvable:$true] %s30
      %36 = dma.hbm_to_vmem [thread:$0]  %s1, 2048, %s31, [#allocation6], 128, 128, 8
    $region9: #{tpu_custom_call.1} parent=1 // pred_fallthru
      _
    // Predicated region
    $region10: #{tpu_custom_call.1} parent=1 // pred_check
      _
    $region11: #{tpu_custom_call.1} parent=1 // pred_check_branch
      %38 = sbr.rel (0) target = $region13
    $region12: #{tpu_custom_call.1} parent=1 // pred_region
      %s40 = ssub.s32 2048, 2048
      %41 = vsyncadd [#allocation6], %s40
      %s42 = sshll.u32 [#allocation7], 4
      %s43 = int_to_ptr.vmem [resolvable:$true] %s42
      %48 = dma.hbm_to_vmem [thread:$0]  %s2, 2048, %s43, [#allocation6], 64, 64, 4
    $region13: #{tpu_custom_call.1} parent=1 // pred_fallthru
      _
    // Predicated region
    $region14: #{tpu_custom_call.1} parent=1 // pred_check
      _
    $region15: #{tpu_custom_call.1} parent=1 // pred_check_branch
      %50 = sbr.rel (0) target = $region17
    $region16: #{tpu_custom_call.1} parent=1 // pred_region
      _
    $region17: #{tpu_custom_call.1} parent=1 // pred_fallthru
      _
    // Predicated region
    $region18: #{tpu_custom_call.1} parent=1 // pred_check
      _
    $region19: #{tpu_custom_call.1} parent=1 // pred_check_branch
      %52 = sbr.rel (0) target = $region21
    $region20: #{tpu_custom_call.1} parent=1 // pred_region
      _
    $region21: #{tpu_custom_call.1} parent=1 // pred_fallthru
      _
    // Predicated region
    $region22: #{tpu_custom_call.1} parent=1 // pred_check
      _
    $region23: #{tpu_custom_call.1} parent=1 // pred_check_branch
      %54 = sbr.rel (0) target = $region25
    $region24: #{tpu_custom_call.1} parent=1 // pred_region
      %55 = dma.done [#allocation3], 2048
    $region25: #{tpu_custom_call.1} parent=1 // pred_fallthru
      _
    // Predicated region
    $region26: #{tpu_custom_call.1} parent=1 // pred_check
      _
    $region27: #{tpu_custom_call.1} parent=1 // pred_check_branch
      %57 = sbr.rel (0) target = $region29
    $region28: #{tpu_custom_call.1} parent=1 // pred_region
      %58 = dma.done [#allocation6], 2048
    $region29: #{tpu_custom_call.1} parent=1 // pred_fallthru
      _
    // Predicated region
    $region30: #{tpu_custom_call.1} parent=1 // pred_check
      _
    $region31: #{tpu_custom_call.1} parent=1 // pred_check_branch
      %60 = sbr.rel (0) target = $region33
    $region32: #{tpu_custom_call.1} parent=1 // pred_region
      %61 = dma.done [#allocation6], 2048
    $region33: #{tpu_custom_call.1} parent=1 // pred_fallthru
      _
    %v63 = vld [vmem:[#allocation2] sm:$0xff]
    %v64 = vld [vmem:[#allocation2 + $0x8] sm:$0xff]
    %v65 = vld [vmem:[#allocation2 + $0x10] sm:$0xff]
    %v66 = vld [vmem:[#allocation2 + $0x18] sm:$0xff]
    %v67 = vld [vmem:[#allocation2 + $0x20] sm:$0xff]
    %v68 = vld [vmem:[#allocation2 + $0x28] sm:$0xff]
    %v69 = vld [vmem:[#allocation2 + $0x30] sm:$0xff]
    %v70 = vld [vmem:[#allocation2 + $0x38] sm:$0xff]
    %v71 = vld [vmem:[#allocation2 + $0x40] sm:$0xff]
    %v72 = vld [vmem:[#allocation2 + $0x48] sm:$0xff]
    %v73 = vld [vmem:[#allocation2 + $0x50] sm:$0xff]
    %v74 = vld [vmem:[#allocation2 + $0x58] sm:$0xff]
    %v75 = vld [vmem:[#allocation2 + $0x60] sm:$0xff]
    %v76 = vld [vmem:[#allocation2 + $0x68] sm:$0xff]
    %v77 = vld [vmem:[#allocation2 + $0x70] sm:$0xff]
    %v78 = vld [vmem:[#allocation2 + $0x78] sm:$0xff]
    %v79 = vpack.c.bf16 %v64, %v63
    %v80 = vpack.c.bf16 %v66, %v65
    %v81 = vpack.c.bf16 %v68, %v67
    %v82 = vpack.c.bf16 %v70, %v69
    %v83 = vpack.c.bf16 %v72, %v71
    %v84 = vpack.c.bf16 %v74, %v73
    %v85 = vpack.c.bf16 %v76, %v75
    %v86 = vpack.c.bf16 %v78, %v77
    %v87 = vld [vmem:[#allocation5] sm:$0xff]
    %v88 = vld [vmem:[#allocation5 + $0x8] sm:$0xff]
    %v89 = vld [vmem:[#allocation5 + $0x10] sm:$0xff]
    %v90 = vld [vmem:[#allocation5 + $0x18] sm:$0xff]
    %v91 = vld [vmem:[#allocation5 + $0x20] sm:$0xff]
    %v92 = vld [vmem:[#allocation5 + $0x28] sm:$0xff]
    %v93 = vld [vmem:[#allocation5 + $0x30] sm:$0xff]
    %v94 = vld [vmem:[#allocation5 + $0x38] sm:$0xff]
    %v95 = vld [vmem:[#allocation5 + $0x40] sm:$0xff]
    %v96 = vld [vmem:[#allocation5 + $0x48] sm:$0xff]
    %v97 = vld [vmem:[#allocation5 + $0x50] sm:$0xff]
    %v98 = vld [vmem:[#allocation5 + $0x58] sm:$0xff]
    %v99 = vld [vmem:[#allocation5 + $0x60] sm:$0xff]
    %v100 = vld [vmem:[#allocation5 + $0x68] sm:$0xff]
    %v101 = vld [vmem:[#allocation5 + $0x70] sm:$0xff]
    %v102 = vld [vmem:[#allocation5 + $0x78] sm:$0xff]
    %v119 = vunpack.c.l.b16 %v87
    %v120 = vunpack.c.h.b16 %v87
    %v121 = vunpack.c.l.b16 %v88
    %v122 = vunpack.c.h.b16 %v88
    %v123 = vunpack.c.l.b16 %v89
    %v124 = vunpack.c.h.b16 %v89
    %v125 = vunpack.c.l.b16 %v90
    %v126 = vunpack.c.h.b16 %v90
    %v127 = vunpack.c.l.b16 %v91
    %v128 = vunpack.c.h.b16 %v91
    %v129 = vunpack.c.l.b16 %v92
    %v130 = vunpack.c.h.b16 %v92
    %v131 = vunpack.c.l.b16 %v93
    %v132 = vunpack.c.h.b16 %v93
    %v133 = vunpack.c.l.b16 %v94
    %v134 = vunpack.c.h.b16 %v94
    %v135 = vunpack.c.l.b16 %v95
    %v136 = vunpack.c.h.b16 %v95
    %v137 = vunpack.c.l.b16 %v96
    %v138 = vunpack.c.h.b16 %v96
    %v139 = vunpack.c.l.b16 %v97
    %v140 = vunpack.c.h.b16 %v97
    %v141 = vunpack.c.l.b16 %v98
    %v142 = vunpack.c.h.b16 %v98
    %v143 = vunpack.c.l.b16 %v99
    %v144 = vunpack.c.h.b16 %v99
    %v145 = vunpack.c.l.b16 %v100
    %v146 = vunpack.c.h.b16 %v100
    %v147 = vunpack.c.l.b16 %v101
    %v148 = vunpack.c.h.b16 %v101
    %v149 = vunpack.c.l.b16 %v102
    %v150 = vunpack.c.h.b16 %v102
    %v151 = vpack.c.b16 %v121, %v119
    %v152 = vpack.c.b16 %v122, %v120
    %v153 = vpack.c.b16 %v125, %v123
    %v154 = vpack.c.b16 %v126, %v124
    %v155 = vpack.c.b16 %v129, %v127
    %v156 = vpack.c.b16 %v130, %v128
    %v157 = vpack.c.b16 %v133, %v131
    %v158 = vpack.c.b16 %v134, %v132
    %v159 = vpack.c.b16 %v137, %v135
    %v160 = vpack.c.b16 %v138, %v136
    %v161 = vpack.c.b16 %v141, %v139
    %v162 = vpack.c.b16 %v142, %v140
    %v163 = vpack.c.b16 %v145, %v143
    %v164 = vpack.c.b16 %v146, %v144
    %v165 = vpack.c.b16 %v149, %v147
    %v166 = vpack.c.b16 %v150, %v148
    %183 = vmatprep.subr.bf16.mxu0 %v152
    %184 = vmatpush1.bf16.msra.mxu0 %v151
    %185 = vmatprep.subr.bf16.mxu0 %v154
    %186 = vmatpush1.bf16.msra.mxu0 %v153
    %187 = vmatprep.subr.bf16.mxu0 %v156
    %188 = vmatpush1.bf16.msra.mxu0 %v155
    %189 = vmatprep.subr.bf16.mxu0 %v158
    %190 = vmatpush1.bf16.msra.mxu0 %v157
    %191 = vmatprep.subr.bf16.mxu0 %v160
    %192 = vmatpush1.bf16.msra.mxu0 %v159
    %193 = vmatprep.subr.bf16.mxu0 %v162
    %194 = vmatpush1.bf16.msra.mxu0 %v161
    %195 = vmatprep.subr.bf16.mxu0 %v164
    %196 = vmatpush1.bf16.msra.mxu0 %v163
    %197 = vmatprep.subr.bf16.mxu0 %v166
    %198 = vmatpush1.bf16.msra.mxu0 %v165
    %199 = vmatprep.subr.bf16.mxu0 0
    %200 = vmatpush1.bf16.msra.mxu0 0
    %201 = vmatprep.subr.bf16.mxu0 0
    %202 = vmatpush1.bf16.msra.mxu0 0
    %203 = vmatprep.subr.bf16.mxu0 0
    %204 = vmatpush1.bf16.msra.mxu0 0
    %205 = vmatprep.subr.bf16.mxu0 0
    %206 = vmatpush1.bf16.msra.mxu0 0
    %207 = vmatprep.subr.bf16.mxu0 0
    %208 = vmatpush1.bf16.msra.mxu0 0
    %209 = vmatprep.subr.bf16.mxu0 0
    %210 = vmatpush1.bf16.msra.mxu0 0
    %211 = vmatprep.subr.bf16.mxu0 0
    %212 = vmatpush1.bf16.msra.mxu0 0
    %213 = vmatprep.subr.bf16.mxu0 0
    %214 = vmatpush1.bf16.msra.mxu0 0
    %215 = vmatprep.mubr.bf16.mxu0 0
    %216 = vmatmul.mubr.bf16.gmra.mrb[0].mxu0 %v79
    %v217 = vpop.f32.mrb[0].mxu0
    %v218 = vadd.f32 0.0, %v217
    %v219 = vpop.f32.mrb[0].mxu0
    %v220 = vadd.f32 0.0, %v219
    %v221 = vpop.f32.mrb[0].mxu0
    %v222 = vadd.f32 0.0, %v221
    %v223 = vpop.f32.mrb[0].mxu0
    %v224 = vadd.f32 0.0, %v223
    %225 = vmatprep.mubr.bf16.mxu0 0
    %226 = vmatmul.mubr.bf16.gmra.mrb[0].mxu0 %v80
    %v227 = vpop.f32.mrb[0].mxu0
    %v228 = vadd.f32 0.0, %v227
    %v229 = vpop.f32.mrb[0].mxu0
    %v230 = vadd.f32 0.0, %v229
    %v231 = vpop.f32.mrb[0].mxu0
    %v232 = vadd.f32 0.0, %v231
    %v233 = vpop.f32.mrb[0].mxu0
    %v234 = vadd.f32 0.0, %v233
    %235 = vmatprep.mubr.bf16.mxu0 0
    %236 = vmatmul.mubr.bf16.gmra.mrb[0].mxu0 %v81
    %v237 = vpop.f32.mrb[0].mxu0
    %v238 = vadd.f32 0.0, %v237
    %v239 = vpop.f32.mrb[0].mxu0
    %v240 = vadd.f32 0.0, %v239
    %v241 = vpop.f32.mrb[0].mxu0
    %v242 = vadd.f32 0.0, %v241
    %v243 = vpop.f32.mrb[0].mxu0
    %v244 = vadd.f32 0.0, %v243
    %245 = vmatprep.mubr.bf16.mxu0 0
    %246 = vmatmul.mubr.bf16.gmra.mrb[0].mxu0 %v82
    %v247 = vpop.f32.mrb[0].mxu0
    %v248 = vadd.f32 0.0, %v247
    %v249 = vpop.f32.mrb[0].mxu0
    %v250 = vadd.f32 0.0, %v249
    %v251 = vpop.f32.mrb[0].mxu0
    %v252 = vadd.f32 0.0, %v251
    %v253 = vpop.f32.mrb[0].mxu0
    %v254 = vadd.f32 0.0, %v253
    %255 = vmatprep.mubr.bf16.mxu0 0
    %256 = vmatmul.mubr.bf16.gmra.mrb[0].mxu0 %v83
    %v257 = vpop.f32.mrb[0].mxu0
    %v258 = vadd.f32 0.0, %v257
    %v259 = vpop.f32.mrb[0].mxu0
    %v260 = vadd.f32 0.0, %v259
    %v261 = vpop.f32.mrb[0].mxu0
    %v262 = vadd.f32 0.0, %v261
    %v263 = vpop.f32.mrb[0].mxu0
    %v264 = vadd.f32 0.0, %v263
    %265 = vmatprep.mubr.bf16.mxu0 0
    %266 = vmatmul.mubr.bf16.gmra.mrb[0].mxu0 %v84
    %v267 = vpop.f32.mrb[0].mxu0
    %v268 = vadd.f32 0.0, %v267
    %v269 = vpop.f32.mrb[0].mxu0
    %v270 = vadd.f32 0.0, %v269
    %v271 = vpop.f32.mrb[0].mxu0
    %v272 = vadd.f32 0.0, %v271
    %v273 = vpop.f32.mrb[0].mxu0
    %v274 = vadd.f32 0.0, %v273
    %275 = vmatprep.mubr.bf16.mxu0 0
    %276 = vmatmul.mubr.bf16.gmra.mrb[0].mxu0 %v85
    %v277 = vpop.f32.mrb[0].mxu0
    %v278 = vadd.f32 0.0, %v277
    %v279 = vpop.f32.mrb[0].mxu0
    %v280 = vadd.f32 0.0, %v279
    %v281 = vpop.f32.mrb[0].mxu0
    %v282 = vadd.f32 0.0, %v281
    %v283 = vpop.f32.mrb[0].mxu0
    %v284 = vadd.f32 0.0, %v283
    %285 = vmatprep.mubr.bf16.mxu0 0
    %286 = vmatmul.mubr.bf16.gmra.mrb[0].mxu0 %v86
    %v287 = vpop.f32.mrb[0].mxu0
    %v288 = vadd.f32 0.0, %v287
    %v289 = vpop.f32.mrb[0].mxu0
    %v290 = vadd.f32 0.0, %v289
    %v291 = vpop.f32.mrb[0].mxu0
    %v292 = vadd.f32 0.0, %v291
    %v293 = vpop.f32.mrb[0].mxu0
    %v294 = vadd.f32 0.0, %v293
    %295 = vdwg.mxu0
    %v296 = vmax.f32 %v218, 0.0
    %v297 = vmax.f32 %v220, 0.0
    %v298 = vmax.f32 %v222, 0.0
    %v299 = vmax.f32 %v224, 0.0
    %v300 = vmax.f32 %v228, 0.0
    %v301 = vmax.f32 %v230, 0.0
    %v302 = vmax.f32 %v232, 0.0
    %v303 = vmax.f32 %v234, 0.0
    %v304 = vmax.f32 %v238, 0.0
    %v305 = vmax.f32 %v240, 0.0
    %v306 = vmax.f32 %v242, 0.0
    %v307 = vmax.f32 %v244, 0.0
    %v308 = vmax.f32 %v248, 0.0
    %v309 = vmax.f32 %v250, 0.0
    %v310 = vmax.f32 %v252, 0.0
    %v311 = vmax.f32 %v254, 0.0
    %v312 = vmax.f32 %v258, 0.0
    %v313 = vmax.f32 %v260, 0.0
    %v314 = vmax.f32 %v262, 0.0
    %v315 = vmax.f32 %v264, 0.0
    %v316 = vmax.f32 %v268, 0.0
    %v317 = vmax.f32 %v270, 0.0
    %v318 = vmax.f32 %v272, 0.0
    %v319 = vmax.f32 %v274, 0.0
    %v320 = vmax.f32 %v278, 0.0
    %v321 = vmax.f32 %v280, 0.0
    %v322 = vmax.f32 %v282, 0.0
    %v323 = vmax.f32 %v284, 0.0
    %v324 = vmax.f32 %v288, 0.0
    %v325 = vmax.f32 %v290, 0.0
    %v326 = vmax.f32 %v292, 0.0
    %v327 = vmax.f32 %v294, 0.0
    %v328 = vpack.c.bf16 %v298, %v296
    %v329 = vpack.c.bf16 %v299, %v297
    %v330 = vpack.c.bf16 %v302, %v300
    %v331 = vpack.c.bf16 %v303, %v301
    %v332 = vpack.c.bf16 %v306, %v304
    %v333 = vpack.c.bf16 %v307, %v305
    %v334 = vpack.c.bf16 %v310, %v308
    %v335 = vpack.c.bf16 %v311, %v309
    %v336 = vpack.c.bf16 %v314, %v312
    %v337 = vpack.c.bf16 %v315, %v313
    %v338 = vpack.c.bf16 %v318, %v316
    %v339 = vpack.c.bf16 %v319, %v317
    %v340 = vpack.c.bf16 %v322, %v320
    %v341 = vpack.c.bf16 %v323, %v321
    %v342 = vpack.c.bf16 %v326, %v324
    %v343 = vpack.c.bf16 %v327, %v325
    %v344 = vld [vmem:[#allocation7] sm:$0xf]
    %v345 = vld [vmem:[#allocation7 + $0x4] sm:$0xf]
    %v346 = vld [vmem:[#allocation7 + $0x8] sm:$0xf]
    %v347 = vld [vmem:[#allocation7 + $0xc] sm:$0xf]
    %v348 = vld [vmem:[#allocation7 + $0x10] sm:$0xf]
    %v349 = vld [vmem:[#allocation7 + $0x14] sm:$0xf]
    %v350 = vld [vmem:[#allocation7 + $0x18] sm:$0xf]
    %v351 = vld [vmem:[#allocation7 + $0x1c] sm:$0xf]
    %v352 = vld [vmem:[#allocation7 + $0x20] sm:$0xf]
    %v353 = vld [vmem:[#allocation7 + $0x24] sm:$0xf]
    %v354 = vld [vmem:[#allocation7 + $0x28] sm:$0xf]
    %v355 = vld [vmem:[#allocation7 + $0x2c] sm:$0xf]
    %v356 = vld [vmem:[#allocation7 + $0x30] sm:$0xf]
    %v357 = vld [vmem:[#allocation7 + $0x34] sm:$0xf]
    %v358 = vld [vmem:[#allocation7 + $0x38] sm:$0xf]
    %v359 = vld [vmem:[#allocation7 + $0x3c] sm:$0xf]
    %v360 = vld [vmem:[#allocation7 + $0x40] sm:$0xf]
    %v361 = vld [vmem:[#allocation7 + $0x44] sm:$0xf]
    %v362 = vld [vmem:[#allocation7 + $0x48] sm:$0xf]
    %v363 = vld [vmem:[#allocation7 + $0x4c] sm:$0xf]
    %v364 = vld [vmem:[#allocation7 + $0x50] sm:$0xf]
    %v365 = vld [vmem:[#allocation7 + $0x54] sm:$0xf]
    %v366 = vld [vmem:[#allocation7 + $0x58] sm:$0xf]
    %v367 = vld [vmem:[#allocation7 + $0x5c] sm:$0xf]
    %v368 = vld [vmem:[#allocation7 + $0x60] sm:$0xf]
    %v369 = vld [vmem:[#allocation7 + $0x64] sm:$0xf]
    %v370 = vld [vmem:[#allocation7 + $0x68] sm:$0xf]
    %v371 = vld [vmem:[#allocation7 + $0x6c] sm:$0xf]
    %v372 = vld [vmem:[#allocation7 + $0x70] sm:$0xf]
    %v373 = vld [vmem:[#allocation7 + $0x74] sm:$0xf]
    %v374 = vld [vmem:[#allocation7 + $0x78] sm:$0xf]
    %v375 = vld [vmem:[#allocation7 + $0x7c] sm:$0xf]
    %v408 = vunpack.c.l.b16 %v344
    %v409 = vunpack.c.l.b16 %v345
    %v410 = vunpack.c.l.b16 %v346
    %v411 = vunpack.c.l.b16 %v347
    %v412 = vunpack.c.l.b16 %v348
    %v413 = vunpack.c.l.b16 %v349
    %v414 = vunpack.c.l.b16 %v350
    %v415 = vunpack.c.l.b16 %v351
    %v416 = vunpack.c.l.b16 %v352
    %v417 = vunpack.c.l.b16 %v353
    %v418 = vunpack.c.l.b16 %v354
    %v419 = vunpack.c.l.b16 %v355
    %v420 = vunpack.c.l.b16 %v356
    %v421 = vunpack.c.l.b16 %v357
    %v422 = vunpack.c.l.b16 %v358
    %v423 = vunpack.c.l.b16 %v359
    %v424 = vunpack.c.l.b16 %v360
    %v425 = vunpack.c.l.b16 %v361
    %v426 = vunpack.c.l.b16 %v362
    %v427 = vunpack.c.l.b16 %v363
    %v428 = vunpack.c.l.b16 %v364
    %v429 = vunpack.c.l.b16 %v365
    %v430 = vunpack.c.l.b16 %v366
    %v431 = vunpack.c.l.b16 %v367
    %v432 = vunpack.c.l.b16 %v368
    %v433 = vunpack.c.l.b16 %v369
    %v434 = vunpack.c.l.b16 %v370
    %v435 = vunpack.c.l.b16 %v371
    %v436 = vunpack.c.l.b16 %v372
    %v437 = vunpack.c.l.b16 %v373
    %v438 = vunpack.c.l.b16 %v374
    %v439 = vunpack.c.l.b16 %v375
    %v440 = vpack.c.b16 %v409, %v408
    %v441 = vpack.c.b16 %v411, %v410
    %v442 = vpack.c.b16 %v413, %v412
    %v443 = vpack.c.b16 %v415, %v414
    %v444 = vpack.c.b16 %v417, %v416
    %v445 = vpack.c.b16 %v419, %v418
    %v446 = vpack.c.b16 %v421, %v420
    %v447 = vpack.c.b16 %v423, %v422
    %v448 = vpack.c.b16 %v425, %v424
    %v449 = vpack.c.b16 %v427, %v426
    %v450 = vpack.c.b16 %v429, %v428
    %v451 = vpack.c.b16 %v431, %v430
    %v452 = vpack.c.b16 %v433, %v432
    %v453 = vpack.c.b16 %v435, %v434
    %v454 = vpack.c.b16 %v437, %v436
    %v455 = vpack.c.b16 %v439, %v438
    %472 = vmatprep.subr.bf16.mxu0 0
    %473 = vmatpush1.bf16.msra.mxu0 %v440
    %474 = vmatprep.subr.bf16.mxu0 0
    %475 = vmatpush1.bf16.msra.mxu0 %v441
    %476 = vmatprep.subr.bf16.mxu0 0
    %477 = vmatpush1.bf16.msra.mxu0 %v442
    %478 = vmatprep.subr.bf16.mxu0 0
    %479 = vmatpush1.bf16.msra.mxu0 %v443
    %480 = vmatprep.subr.bf16.mxu0 0
    %481 = vmatpush1.bf16.msra.mxu0 %v444
    %482 = vmatprep.subr.bf16.mxu0 0
    %483 = vmatpush1.bf16.msra.mxu0 %v445
    %484 = vmatprep.subr.bf16.mxu0 0
    %485 = vmatpush1.bf16.msra.mxu0 %v446
    %486 = vmatprep.subr.bf16.mxu0 0
    %487 = vmatpush1.bf16.msra.mxu0 %v447
    %488 = vmatprep.subr.bf16.mxu0 0
    %489 = vmatpush1.bf16.msra.mxu0 %v448
    %490 = vmatprep.subr.bf16.mxu0 0
    %491 = vmatpush1.bf16.msra.mxu0 %v449
    %492 = vmatprep.subr.bf16.mxu0 0
    %493 = vmatpush1.bf16.msra.mxu0 %v450
    %494 = vmatprep.subr.bf16.mxu0 0
    %495 = vmatpush1.bf16.msra.mxu0 %v451
    %496 = vmatprep.subr.bf16.mxu0 0
    %497 = vmatpush1.bf16.msra.mxu0 %v452
    %498 = vmatprep.subr.bf16.mxu0 0
    %499 = vmatpush1.bf16.msra.mxu0 %v453
    %500 = vmatprep.subr.bf16.mxu0 0
    %501 = vmatpush1.bf16.msra.mxu0 %v454
    %502 = vmatprep.subr.bf16.mxu0 0
    %503 = vmatpush1.bf16.msra.mxu0 %v455
    %504 = vmatprep.mubr.bf16.mxu0 %v329
    %505 = vmatmul.mubr.bf16.gmra.mrb[0].mxu0 %v328
    %v506 = vpop.f32.mrb[0].mxu0
    %v507 = vadd.f32 %v63, %v506
    %v508 = vpop.f32.mrb[0].mxu0
    %v509 = vpop.f32.mrb[0].mxu0
    %v510 = vadd.f32 %v64, %v509
    %v511 = vpop.f32.mrb[0].mxu0
    %512 = vmatprep.mubr.bf16.mxu0 %v331
    %513 = vmatmul.mubr.bf16.gmra.mrb[0].mxu0 %v330
    %v514 = vpop.f32.mrb[0].mxu0
    %v515 = vadd.f32 %v65, %v514
    %v516 = vpop.f32.mrb[0].mxu0
    %v517 = vpop.f32.mrb[0].mxu0
    %v518 = vadd.f32 %v66, %v517
    %v519 = vpop.f32.mrb[0].mxu0
    %520 = vmatprep.mubr.bf16.mxu0 %v333
    %521 = vmatmul.mubr.bf16.gmra.mrb[0].mxu0 %v332
    %v522 = vpop.f32.mrb[0].mxu0
    %v523 = vadd.f32 %v67, %v522
    %v524 = vpop.f32.mrb[0].mxu0
    %v525 = vpop.f32.mrb[0].mxu0
    %v526 = vadd.f32 %v68, %v525
    %v527 = vpop.f32.mrb[0].mxu0
    %528 = vmatprep.mubr.bf16.mxu0 %v335
    %529 = vmatmul.mubr.bf16.gmra.mrb[0].mxu0 %v334
    %v530 = vpop.f32.mrb[0].mxu0
    %v531 = vadd.f32 %v69, %v530
    %v532 = vpop.f32.mrb[0].mxu0
    %v533 = vpop.f32.mrb[0].mxu0
    %v534 = vadd.f32 %v70, %v533
    %v535 = vpop.f32.mrb[0].mxu0
    %536 = vmatprep.mubr.bf16.mxu0 %v337
    %537 = vmatmul.mubr.bf16.gmra.mrb[0].mxu0 %v336
    %v538 = vpop.f32.mrb[0].mxu0
    %v539 = vadd.f32 %v71, %v538
    %v540 = vpop.f32.mrb[0].mxu0
    %v541 = vpop.f32.mrb[0].mxu0
    %v542 = vadd.f32 %v72, %v541
    %v543 = vpop.f32.mrb[0].mxu0
    %544 = vmatprep.mubr.bf16.mxu0 %v339
    %545 = vmatmul.mubr.bf16.gmra.mrb[0].mxu0 %v338
    %v546 = vpop.f32.mrb[0].mxu0
    %v547 = vadd.f32 %v73, %v546
    %v548 = vpop.f32.mrb[0].mxu0
    %v549 = vpop.f32.mrb[0].mxu0
    %v550 = vadd.f32 %v74, %v549
    %v551 = vpop.f32.mrb[0].mxu0
    %552 = vmatprep.mubr.bf16.mxu0 %v341
    %553 = vmatmul.mubr.bf16.gmra.mrb[0].mxu0 %v340
    %v554 = vpop.f32.mrb[0].mxu0
    %v555 = vadd.f32 %v75, %v554
    %v556 = vpop.f32.mrb[0].mxu0
    %v557 = vpop.f32.mrb[0].mxu0
    %v558 = vadd.f32 %v76, %v557
    %v559 = vpop.f32.mrb[0].mxu0
    %560 = vmatprep.mubr.bf16.mxu0 %v343
    %561 = vmatmul.mubr.bf16.gmra.mrb[0].mxu0 %v342
    %v562 = vpop.f32.mrb[0].mxu0
    %v563 = vadd.f32 %v77, %v562
    %v564 = vpop.f32.mrb[0].mxu0
    %v565 = vpop.f32.mrb[0].mxu0
    %v566 = vadd.f32 %v78, %v565
    %v567 = vpop.f32.mrb[0].mxu0
    %568 = vdwg.mxu0
    %569 = vadd.xlane.f32.xlu0 %v507
    %v570 = vpop.xlane.xlu0 %569
    %571 = vadd.xlane.f32.xlu0 %v510
    %v572 = vpop.xlane.xlu0 %571
    %573 = vadd.xlane.f32.xlu0 %v515
    %v574 = vpop.xlane.xlu0 %573
    %575 = vadd.xlane.f32.xlu0 %v518
    %v576 = vpop.xlane.xlu0 %575
    %577 = vadd.xlane.f32.xlu0 %v523
    %v578 = vpop.xlane.xlu0 %577
    %579 = vadd.xlane.f32.xlu0 %v526
    %v580 = vpop.xlane.xlu0 %579
    %581 = vadd.xlane.f32.xlu0 %v531
    %v582 = vpop.xlane.xlu0 %581
    %583 = vadd.xlane.f32.xlu0 %v534
    %v584 = vpop.xlane.xlu0 %583
    %585 = vadd.xlane.f32.xlu0 %v539
    %v586 = vpop.xlane.xlu0 %585
    %587 = vadd.xlane.f32.xlu0 %v542
    %v588 = vpop.xlane.xlu0 %587
    %589 = vadd.xlane.f32.xlu0 %v547
    %v590 = vpop.xlane.xlu0 %589
    %591 = vadd.xlane.f32.xlu0 %v550
    %v592 = vpop.xlane.xlu0 %591
    %593 = vadd.xlane.f32.xlu0 %v555
    %v594 = vpop.xlane.xlu0 %593
    %595 = vadd.xlane.f32.xlu0 %v558
    %v596 = vpop.xlane.xlu0 %595
    %597 = vadd.xlane.f32.xlu0 %v563
    %v598 = vpop.xlane.xlu0 %597
    %599 = vadd.xlane.f32.xlu0 %v566
    %v600 = vpop.xlane.xlu0 %599
    %v601 = vrcp.pop 128.0
    %v602 = vmul.f32 %v570, %v601
    %v603 = vmul.f32 %v572, %v601
    %v604 = vmul.f32 %v574, %v601
    %v605 = vmul.f32 %v576, %v601
    %v606 = vmul.f32 %v578, %v601
    %v607 = vmul.f32 %v580, %v601
    %v608 = vmul.f32 %v582, %v601
    %v609 = vmul.f32 %v584, %v601
    %v610 = vmul.f32 %v586, %v601
    %v611 = vmul.f32 %v588, %v601
    %v612 = vmul.f32 %v590, %v601
    %v613 = vmul.f32 %v592, %v601
    %v614 = vmul.f32 %v594, %v601
    %v615 = vmul.f32 %v596, %v601
    %v616 = vmul.f32 %v598, %v601
    %v617 = vmul.f32 %v600, %v601
    %v618 = vmul.f32 %v507, %v507
    %v619 = vmul.f32 %v510, %v510
    %v620 = vmul.f32 %v515, %v515
    %v621 = vmul.f32 %v518, %v518
    %v622 = vmul.f32 %v523, %v523
    %v623 = vmul.f32 %v526, %v526
    %v624 = vmul.f32 %v531, %v531
    %v625 = vmul.f32 %v534, %v534
    %v626 = vmul.f32 %v539, %v539
    %v627 = vmul.f32 %v542, %v542
    %v628 = vmul.f32 %v547, %v547
    %v629 = vmul.f32 %v550, %v550
    %v630 = vmul.f32 %v555, %v555
    %v631 = vmul.f32 %v558, %v558
    %v632 = vmul.f32 %v563, %v563
    %v633 = vmul.f32 %v566, %v566
    %634 = vadd.xlane.f32.xlu0 %v618
    %v635 = vpop.xlane.xlu0 %634
    %636 = vadd.xlane.f32.xlu0 %v619
    %v637 = vpop.xlane.xlu0 %636
    %638 = vadd.xlane.f32.xlu0 %v620
    %v639 = vpop.xlane.xlu0 %638
    %640 = vadd.xlane.f32.xlu0 %v621
    %v641 = vpop.xlane.xlu0 %640
    %642 = vadd.xlane.f32.xlu0 %v622
    %v643 = vpop.xlane.xlu0 %642
    %644 = vadd.xlane.f32.xlu0 %v623
    %v645 = vpop.xlane.xlu0 %644
    %646 = vadd.xlane.f32.xlu0 %v624
    %v647 = vpop.xlane.xlu0 %646
    %648 = vadd.xlane.f32.xlu0 %v625
    %v649 = vpop.xlane.xlu0 %648
    %650 = vadd.xlane.f32.xlu0 %v626
    %v651 = vpop.xlane.xlu0 %650
    %652 = vadd.xlane.f32.xlu0 %v627
    %v653 = vpop.xlane.xlu0 %652
    %654 = vadd.xlane.f32.xlu0 %v628
    %v655 = vpop.xlane.xlu0 %654
    %656 = vadd.xlane.f32.xlu0 %v629
    %v657 = vpop.xlane.xlu0 %656
    %658 = vadd.xlane.f32.xlu0 %v630
    %v659 = vpop.xlane.xlu0 %658
    %660 = vadd.xlane.f32.xlu0 %v631
    %v661 = vpop.xlane.xlu0 %660
    %662 = vadd.xlane.f32.xlu0 %v632
    %v663 = vpop.xlane.xlu0 %662
    %664 = vadd.xlane.f32.xlu0 %v633
    %v665 = vpop.xlane.xlu0 %664
    %v666 = vmul.f32 %v635, %v601
    %v667 = vmul.f32 %v637, %v601
    %v668 = vmul.f32 %v639, %v601
    %v669 = vmul.f32 %v641, %v601
    %v670 = vmul.f32 %v643, %v601
    %v671 = vmul.f32 %v645, %v601
    %v672 = vmul.f32 %v647, %v601
    %v673 = vmul.f32 %v649, %v601
    %v674 = vmul.f32 %v651, %v601
    %v675 = vmul.f32 %v653, %v601
    %v676 = vmul.f32 %v655, %v601
    %v677 = vmul.f32 %v657, %v601
    %v678 = vmul.f32 %v659, %v601
    %v679 = vmul.f32 %v661, %v601
    %v680 = vmul.f32 %v663, %v601
    %v681 = vmul.f32 %v665, %v601
    %v682 = vmul.f32 %v602, %v602
    %v683 = vmul.f32 %v603, %v603
    %v684 = vmul.f32 %v604, %v604
    %v685 = vmul.f32 %v605, %v605
    %v686 = vmul.f32 %v606, %v606
    %v687 = vmul.f32 %v607, %v607
    %v688 = vmul.f32 %v608, %v608
    %v689 = vmul.f32 %v609, %v609
    %v690 = vmul.f32 %v610, %v610
    %v691 = vmul.f32 %v611, %v611
    %v692 = vmul.f32 %v612, %v612
    %v693 = vmul.f32 %v613, %v613
    %v694 = vmul.f32 %v614, %v614
    %v695 = vmul.f32 %v615, %v615
    %v696 = vmul.f32 %v616, %v616
    %v697 = vmul.f32 %v617, %v617
    %v698 = vsub.f32 %v666, %v682
    %v699 = vsub.f32 %v667, %v683
    %v700 = vsub.f32 %v668, %v684
    %v701 = vsub.f32 %v669, %v685
    %v702 = vsub.f32 %v670, %v686
    %v703 = vsub.f32 %v671, %v687
    %v704 = vsub.f32 %v672, %v688
    %v705 = vsub.f32 %v673, %v689
    %v706 = vsub.f32 %v674, %v690
    %v707 = vsub.f32 %v675, %v691
    %v708 = vsub.f32 %v676, %v692
    %v709 = vsub.f32 %v677, %v693
    %v710 = vsub.f32 %v678, %v694
    %v711 = vsub.f32 %v679, %v695
    %v712 = vsub.f32 %v680, %v696
    %v713 = vsub.f32 %v681, %v697
    %v714 = vmax.f32 %v698, 0.0
    %v715 = vmax.f32 %v699, 0.0
    %v716 = vmax.f32 %v700, 0.0
    %v717 = vmax.f32 %v701, 0.0
    %v718 = vmax.f32 %v702, 0.0
    %v719 = vmax.f32 %v703, 0.0
    %v720 = vmax.f32 %v704, 0.0
    %v721 = vmax.f32 %v705, 0.0
    %v722 = vmax.f32 %v706, 0.0
    %v723 = vmax.f32 %v707, 0.0
    %v724 = vmax.f32 %v708, 0.0
    %v725 = vmax.f32 %v709, 0.0
    %v726 = vmax.f32 %v710, 0.0
    %v727 = vmax.f32 %v711, 0.0
    %v728 = vmax.f32 %v712, 0.0
    %v729 = vmax.f32 %v713, 0.0
    %v730 = vsub.f32 %v507, %v602
    %v731 = vsub.f32 %v510, %v603
    %v732 = vsub.f32 %v515, %v604
    %v733 = vsub.f32 %v518, %v605
    %v734 = vsub.f32 %v523, %v606
    %v735 = vsub.f32 %v526, %v607
    %v736 = vsub.f32 %v531, %v608
    %v737 = vsub.f32 %v534, %v609
    %v738 = vsub.f32 %v539, %v610
    %v739 = vsub.f32 %v542, %v611
    %v740 = vsub.f32 %v547, %v612
    %v741 = vsub.f32 %v550, %v613
    %v742 = vsub.f32 %v555, %v614
    %v743 = vsub.f32 %v558, %v615
    %v744 = vsub.f32 %v563, %v616
    %v745 = vsub.f32 %v566, %v617
    %v746 = vadd.f32 %v714, 1e-05
    %v747 = vadd.f32 %v715, 1e-05
    %v748 = vadd.f32 %v716, 1e-05
    %v749 = vadd.f32 %v717, 1e-05
    %v750 = vadd.f32 %v718, 1e-05
    %v751 = vadd.f32 %v719, 1e-05
    %v752 = vadd.f32 %v720, 1e-05
    %v753 = vadd.f32 %v721, 1e-05
    %v754 = vadd.f32 %v722, 1e-05
    %v755 = vadd.f32 %v723, 1e-05
    %v756 = vadd.f32 %v724, 1e-05
    %v757 = vadd.f32 %v725, 1e-05
    %v758 = vadd.f32 %v726, 1e-05
    %v759 = vadd.f32 %v727, 1e-05
    %v760 = vadd.f32 %v728, 1e-05
    %v761 = vadd.f32 %v729, 1e-05
    %v762 = vrsqrt.pop %v746
    %v763 = vrsqrt.pop %v747
    %v764 = vrsqrt.pop %v748
    %v765 = vrsqrt.pop %v749
    %v766 = vrsqrt.pop %v750
    %v767 = vrsqrt.pop %v751
    %v768 = vrsqrt.pop %v752
    %v769 = vrsqrt.pop %v753
    %v770 = vrsqrt.pop %v754
    %v771 = vrsqrt.pop %v755
    %v772 = vrsqrt.pop %v756
    %v773 = vrsqrt.pop %v757
    %v774 = vrsqrt.pop %v758
    %v775 = vrsqrt.pop %v759
    %v776 = vrsqrt.pop %v760
    %v777 = vrsqrt.pop %v761
    %v778 = vmul.f32 %v730, %v762
    %v779 = vmul.f32 %v731, %v763
    %v780 = vmul.f32 %v732, %v764
    %v781 = vmul.f32 %v733, %v765
    %v782 = vmul.f32 %v734, %v766
    %v783 = vmul.f32 %v735, %v767
    %v784 = vmul.f32 %v736, %v768
    %v785 = vmul.f32 %v737, %v769
    %v786 = vmul.f32 %v738, %v770
    %v787 = vmul.f32 %v739, %v771
    %v788 = vmul.f32 %v740, %v772
    %v789 = vmul.f32 %v741, %v773
    %v790 = vmul.f32 %v742, %v774
    %v791 = vmul.f32 %v743, %v775
    %v792 = vmul.f32 %v744, %v776
    %v793 = vmul.f32 %v745, %v777
    %v794 = vld [vmem:[%s3] sm:$0x1]
    %v796 = vlaneseq
    %v797 = vshrl.u32 %v796, 7
    %v798 = vsub.s32 0, %v797
    %v799 = vrot.slane %v794, %v798
    %v801 = vmul.f32 %v778, %v799
    %v802 = vmul.f32 %v779, %v799
    %v803 = vmul.f32 %v780, %v799
    %v804 = vmul.f32 %v781, %v799
    %v805 = vmul.f32 %v782, %v799
    %v806 = vmul.f32 %v783, %v799
    %v807 = vmul.f32 %v784, %v799
    %v808 = vmul.f32 %v785, %v799
    %v809 = vmul.f32 %v786, %v799
    %v810 = vmul.f32 %v787, %v799
    %v811 = vmul.f32 %v788, %v799
    %v812 = vmul.f32 %v789, %v799
    %v813 = vmul.f32 %v790, %v799
    %v814 = vmul.f32 %v791, %v799
    %v815 = vmul.f32 %v792, %v799
    %v816 = vmul.f32 %v793, %v799
    %v817 = vld [vmem:[%s4] sm:$0x1]
    %v819 = vlaneseq
    %v820 = vshrl.u32 %v819, 7
    %v821 = vsub.s32 0, %v820
    %v822 = vrot.slane %v817, %v821
    %v824 = vadd.f32 %v801, %v822
    %v825 = vadd.f32 %v802, %v822
    %v826 = vadd.f32 %v803, %v822
    %v827 = vadd.f32 %v804, %v822
    %v828 = vadd.f32 %v805, %v822
    %v829 = vadd.f32 %v806, %v822
    %v830 = vadd.f32 %v807, %v822
    %v831 = vadd.f32 %v808, %v822
    %v832 = vadd.f32 %v809, %v822
    %v833 = vadd.f32 %v810, %v822
    %v834 = vadd.f32 %v811, %v822
    %v835 = vadd.f32 %v812, %v822
    %v836 = vadd.f32 %v813, %v822
    %v837 = vadd.f32 %v814, %v822
    %v838 = vadd.f32 %v815, %v822
    %v839 = vadd.f32 %v816, %v822
    %840 = vst [vmem:[#allocation8] sm:$0xff] %v824
    %841 = vst [vmem:[#allocation8 + $0x8] sm:$0xff] %v825
    %842 = vst [vmem:[#allocation8 + $0x10] sm:$0xff] %v826
    %843 = vst [vmem:[#allocation8 + $0x18] sm:$0xff] %v827
    %844 = vst [vmem:[#allocation8 + $0x20] sm:$0xff] %v828
    %845 = vst [vmem:[#allocation8 + $0x28] sm:$0xff] %v829
    %846 = vst [vmem:[#allocation8 + $0x30] sm:$0xff] %v830
    %847 = vst [vmem:[#allocation8 + $0x38] sm:$0xff] %v831
    %848 = vst [vmem:[#allocation8 + $0x40] sm:$0xff] %v832
    %849 = vst [vmem:[#allocation8 + $0x48] sm:$0xff] %v833
    %850 = vst [vmem:[#allocation8 + $0x50] sm:$0xff] %v834
    %851 = vst [vmem:[#allocation8 + $0x58] sm:$0xff] %v835
    %852 = vst [vmem:[#allocation8 + $0x60] sm:$0xff] %v836
    %853 = vst [vmem:[#allocation8 + $0x68] sm:$0xff] %v837
    %854 = vst [vmem:[#allocation8 + $0x70] sm:$0xff] %v838
    %855 = vst [vmem:[#allocation8 + $0x78] sm:$0xff] %v839
    // Predicated region
    $region34: #{tpu_custom_call.1} parent=1 // pred_check
      _
    $region35: #{tpu_custom_call.1} parent=1 // pred_check_branch
      %857 = sbr.rel (0) target = $region37
    $region36: #{tpu_custom_call.1} parent=1 // pred_region
      %s859 = ssub.s32 2048, 2048
      %860 = vsyncadd [#allocation4], %s859
      %s861 = sshll.u32 [#allocation8], 4
      %s862 = int_to_ptr.vmem [resolvable:$true] %s861
      %867 = dma.vmem_to_hbm [thread:$0]  %s862, 2048, %s5, [#allocation4], 128, 128, 8
    $region37: #{tpu_custom_call.1} parent=1 // pred_fallthru
      _
    // Predicated region
    $region38: #{tpu_custom_call.1} parent=1 // pred_check
      _
    $region39: #{tpu_custom_call.1} parent=1 // pred_check_branch
      %869 = sbr.rel (0) target = $region41
    $region40: #{tpu_custom_call.1} parent=1 // pred_region
      %870 = dma.done [#allocation4], 2048
    $region41: #{tpu_custom_call.1} parent=1 // pred_fallthru
      _
    %871 = vsyncpa [#allocation3], 1
    %872 = vsyncpa [#allocation6], 1
    %873 = vsyncpa [#allocation4], 1

// kernel: tpu_custom_call.1
$region0: #{tpu_custom_call.1}
  #allocation0 [shape = 'u32[]', space=smem, size = 0x4, offset = 0x4, fixed_abs, tag = 'smem constant byte address 0x4 - core index']
  #allocation1 [shape = 'u32[144,128]{1,0:T(1,128)}', space=vmem, size = 0x12000, scoped, tag = 'internal scratch']
  %s0 = inlined_call_operand.hbm [shape: f32[128,128], index: 0, kind: input, shape index: {}]
  %s1 = inlined_call_operand.hbm [shape: bf16[128,256], index: 1, kind: input, shape index: {}]
  %s2 = inlined_call_operand.hbm [shape: bf16[256,128], index: 2, kind: input, shape index: {}]
  %s3 = inlined_call_operand.vmem [shape: f32[1,128], index: 3, kind: input, shape index: {}]
  %s4 = inlined_call_operand.vmem [shape: f32[1,128], index: 4, kind: input, shape index: {}]
  %s5 = inlined_call_operand.hbm [shape: f32[128,128], index: 5, kind: output, shape index: {}]
  %s6 = sld [smem:[#allocation0]]
  $region42: #{tpu_custom_call.1} parent=0
    _
  %s8 = ssub.s32 1, %s6
  %s9 = scalar_select 0, %s8, %s6
  $region1: #{tpu_custom_call.1} parent=0
    #allocation2 [shape = 'u8[65536]{0}', space=vmem, size = 0x10000, scoped, tag = 'input window, operand 0, single buffered']
    #allocation3 [shape = 's32[1]{0}', space=sflag, size = 0x4, scoped, tag = 'scoped memory for tpu_custom_call.1']
    #allocation4 [shape = 's32[1]{0}', space=sflag, size = 0x4, scoped, tag = 'scoped memory for tpu_custom_call.1']
    #allocation5 [shape = 'u8[65536]{0}', space=vmem, size = 0x10000, scoped, tag = 'input window, operand 1, single buffered']
    #allocation6 [shape = 's32[1]{0}', space=sflag, size = 0x4, scoped, tag = 'scoped memory for tpu_custom_call.1']
    #allocation7 [shape = 'u8[65536]{0}', space=vmem, size = 0x10000, scoped, tag = 'input window, operand 2, single buffered']
    #allocation8 [shape = 'u8[65536]{0}', space=vmem, size = 0x10000, scoped, tag = 'output window, operand 0, single buffered']
    %10 = vsyncpa [#allocation3], 0
    %11 = vsyncpa [#allocation6], 0
    %12 = vsyncpa [#allocation4], 0
    // Predicated region
    $region2: #{tpu_custom_call.1} parent=1 // pred_check
      _
    $region3: #{tpu_custom_call.1} parent=1 // pred_check_branch
      %14 = sbr.rel (0) target = $region5
    $region4: #{tpu_custom_call.1} parent=1 // pred_region
      %s16 = ssub.s32 2048, 2048
      %17 = vsyncadd [#allocation3], %s16
      %s18 = sshll.u32 [#allocation2], 4
      %s19 = int_to_ptr.vmem [resolvable:$true] %s18
      %24 = dma.hbm_to_vmem [thread:$0]  %s0, 2048, %s19, [#allocation3], 128, 128, 8
    $region5: #{tpu_custom_call.1} parent=1 // pred_fallthru
      _
    // Predicated region
    $region6: #{tpu_custom_call.1} parent=1 // pred_check
      _
    $region7: #{tpu_custom_call.1} parent=1 // pred_check_branch
      %26 = sbr.rel (0) target = $region9
    $region8: #{tpu_custom_call.1} parent=1 // pred_region
      %s28 = ssub.s32 2048, 2048
      %29 = vsyncadd [#allocation6], %s28
      %s30 = sshll.u32 [#allocation5], 4
      %s31 = int_to_ptr.vmem [resolvable:$true] %s30
      %36 = dma.hbm_to_vmem [thread:$0]  %s1, 2048, %s31, [#allocation6], 128, 128, 8
    $region9: #{tpu_custom_call.1} parent=1 // pred_fallthru
      _
    // Predicated region
    $region10: #{tpu_custom_call.1} parent=1 // pred_check
      _
    $region11: #{tpu_custom_call.1} parent=1 // pred_check_branch
      %38 = sbr.rel (0) target = $region13
    $region12: #{tpu_custom_call.1} parent=1 // pred_region
      %s40 = ssub.s32 2048, 2048
      %41 = vsyncadd [#allocation6], %s40
      %s42 = sshll.u32 [#allocation7], 4
      %s43 = int_to_ptr.vmem [resolvable:$true] %s42
      %48 = dma.hbm_to_vmem [thread:$0]  %s2, 2048, %s43, [#allocation6], 64, 64, 4
    $region13: #{tpu_custom_call.1} parent=1 // pred_fallthru
      _
    // Predicated region
    $region14: #{tpu_custom_call.1} parent=1 // pred_check
      _
    $region15: #{tpu_custom_call.1} parent=1 // pred_check_branch
      %50 = sbr.rel (0) target = $region17
    $region16: #{tpu_custom_call.1} parent=1 // pred_region
      _
    $region17: #{tpu_custom_call.1} parent=1 // pred_fallthru
      _
    // Predicated region
    $region18: #{tpu_custom_call.1} parent=1 // pred_check
      _
    $region19: #{tpu_custom_call.1} parent=1 // pred_check_branch
      %52 = sbr.rel (0) target = $region21
    $region20: #{tpu_custom_call.1} parent=1 // pred_region
      _
    $region21: #{tpu_custom_call.1} parent=1 // pred_fallthru
      _
    // Predicated region
    $region22: #{tpu_custom_call.1} parent=1 // pred_check
      _
    $region23: #{tpu_custom_call.1} parent=1 // pred_check_branch
      %54 = sbr.rel (0) target = $region25
    $region24: #{tpu_custom_call.1} parent=1 // pred_region
      %55 = dma.done [#allocation3], 2048
    $region25: #{tpu_custom_call.1} parent=1 // pred_fallthru
      _
    // Predicated region
    $region26: #{tpu_custom_call.1} parent=1 // pred_check
      _
    $region27: #{tpu_custom_call.1} parent=1 // pred_check_branch
      %57 = sbr.rel (0) target = $region29
    $region28: #{tpu_custom_call.1} parent=1 // pred_region
      %58 = dma.done [#allocation6], 2048
    $region29: #{tpu_custom_call.1} parent=1 // pred_fallthru
      _
    // Predicated region
    $region30: #{tpu_custom_call.1} parent=1 // pred_check
      _
    $region31: #{tpu_custom_call.1} parent=1 // pred_check_branch
      %60 = sbr.rel (0) target = $region33
    $region32: #{tpu_custom_call.1} parent=1 // pred_region
      %61 = dma.done [#allocation6], 2048
    $region33: #{tpu_custom_call.1} parent=1 // pred_fallthru
      _
    %v63 = vld [vmem:[#allocation2] sm:$0xff]
    %v64 = vld [vmem:[#allocation2 + $0x8] sm:$0xff]
    %v65 = vld [vmem:[#allocation2 + $0x10] sm:$0xff]
    %v66 = vld [vmem:[#allocation2 + $0x18] sm:$0xff]
    %v67 = vld [vmem:[#allocation2 + $0x20] sm:$0xff]
    %v68 = vld [vmem:[#allocation2 + $0x28] sm:$0xff]
    %v69 = vld [vmem:[#allocation2 + $0x30] sm:$0xff]
    %v70 = vld [vmem:[#allocation2 + $0x38] sm:$0xff]
    %v71 = vld [vmem:[#allocation2 + $0x40] sm:$0xff]
    %v72 = vld [vmem:[#allocation2 + $0x48] sm:$0xff]
    %v73 = vld [vmem:[#allocation2 + $0x50] sm:$0xff]
    %v74 = vld [vmem:[#allocation2 + $0x58] sm:$0xff]
    %v75 = vld [vmem:[#allocation2 + $0x60] sm:$0xff]
    %v76 = vld [vmem:[#allocation2 + $0x68] sm:$0xff]
    %v77 = vld [vmem:[#allocation2 + $0x70] sm:$0xff]
    %v78 = vld [vmem:[#allocation2 + $0x78] sm:$0xff]
    %v79 = vpack.c.bf16 %v64, %v63
    %v80 = vpack.c.bf16 %v66, %v65
    %v81 = vpack.c.bf16 %v68, %v67
    %v82 = vpack.c.bf16 %v70, %v69
    %v83 = vpack.c.bf16 %v72, %v71
    %v84 = vpack.c.bf16 %v74, %v73
    %v85 = vpack.c.bf16 %v76, %v75
    %v86 = vpack.c.bf16 %v78, %v77
    %v87 = vld [vmem:[#allocation5] sm:$0xff]
    %v88 = vld [vmem:[#allocation5 + $0x8] sm:$0xff]
    %v89 = vld [vmem:[#allocation5 + $0x10] sm:$0xff]
    %v90 = vld [vmem:[#allocation5 + $0x18] sm:$0xff]
    %v91 = vld [vmem:[#allocation5 + $0x20] sm:$0xff]
    %v92 = vld [vmem:[#allocation5 + $0x28] sm:$0xff]
    %v93 = vld [vmem:[#allocation5 + $0x30] sm:$0xff]
    %v94 = vld [vmem:[#allocation5 + $0x38] sm:$0xff]
    %v95 = vld [vmem:[#allocation5 + $0x40] sm:$0xff]
    %v96 = vld [vmem:[#allocation5 + $0x48] sm:$0xff]
    %v97 = vld [vmem:[#allocation5 + $0x50] sm:$0xff]
    %v98 = vld [vmem:[#allocation5 + $0x58] sm:$0xff]
    %v99 = vld [vmem:[#allocation5 + $0x60] sm:$0xff]
    %v100 = vld [vmem:[#allocation5 + $0x68] sm:$0xff]
    %v101 = vld [vmem:[#allocation5 + $0x70] sm:$0xff]
    %v102 = vld [vmem:[#allocation5 + $0x78] sm:$0xff]
    %v119 = vunpack.c.l.b16 %v87
    %v120 = vunpack.c.h.b16 %v87
    %v121 = vunpack.c.l.b16 %v88
    %v122 = vunpack.c.h.b16 %v88
    %v123 = vunpack.c.l.b16 %v89
    %v124 = vunpack.c.h.b16 %v89
    %v125 = vunpack.c.l.b16 %v90
    %v126 = vunpack.c.h.b16 %v90
    %v127 = vunpack.c.l.b16 %v91
    %v128 = vunpack.c.h.b16 %v91
    %v129 = vunpack.c.l.b16 %v92
    %v130 = vunpack.c.h.b16 %v92
    %v131 = vunpack.c.l.b16 %v93
    %v132 = vunpack.c.h.b16 %v93
    %v133 = vunpack.c.l.b16 %v94
    %v134 = vunpack.c.h.b16 %v94
    %v135 = vunpack.c.l.b16 %v95
    %v136 = vunpack.c.h.b16 %v95
    %v137 = vunpack.c.l.b16 %v96
    %v138 = vunpack.c.h.b16 %v96
    %v139 = vunpack.c.l.b16 %v97
    %v140 = vunpack.c.h.b16 %v97
    %v141 = vunpack.c.l.b16 %v98
    %v142 = vunpack.c.h.b16 %v98
    %v143 = vunpack.c.l.b16 %v99
    %v144 = vunpack.c.h.b16 %v99
    %v145 = vunpack.c.l.b16 %v100
    %v146 = vunpack.c.h.b16 %v100
    %v147 = vunpack.c.l.b16 %v101
    %v148 = vunpack.c.h.b16 %v101
    %v149 = vunpack.c.l.b16 %v102
    %v150 = vunpack.c.h.b16 %v102
    %v151 = vpack.c.b16 %v121, %v119
    %v152 = vpack.c.b16 %v122, %v120
    %v153 = vpack.c.b16 %v125, %v123
    %v154 = vpack.c.b16 %v126, %v124
    %v155 = vpack.c.b16 %v129, %v127
    %v156 = vpack.c.b16 %v130, %v128
    %v157 = vpack.c.b16 %v133, %v131
    %v158 = vpack.c.b16 %v134, %v132
    %v159 = vpack.c.b16 %v137, %v135
    %v160 = vpack.c.b16 %v138, %v136
    %v161 = vpack.c.b16 %v141, %v139
    %v162 = vpack.c.b16 %v142, %v140
    %v163 = vpack.c.b16 %v145, %v143
    %v164 = vpack.c.b16 %v146, %v144
    %v165 = vpack.c.b16 %v149, %v147
    %v166 = vpack.c.b16 %v150, %v148
    %183 = vmatprep.subr.bf16.mxu0 %v152
    %184 = vmatpush1.bf16.msra.mxu0 %v151
    %185 = vmatprep.subr.bf16.mxu0 %v154
    %186 = vmatpush1.bf16.msra.mxu0 %v153
    %187 = vmatprep.subr.bf16.mxu0 %v156
    %188 = vmatpush1.bf16.msra.mxu0 %v155
    %189 = vmatprep.subr.bf16.mxu0 %v158
    %190 = vmatpush1.bf16.msra.mxu0 %v157
    %191 = vmatprep.subr.bf16.mxu0 %v160
    %192 = vmatpush1.bf16.msra.mxu0 %v159
    %193 = vmatprep.subr.bf16.mxu0 %v162
    %194 = vmatpush1.bf16.msra.mxu0 %v161
    %195 = vmatprep.subr.bf16.mxu0 %v164
    %196 = vmatpush1.bf16.msra.mxu0 %v163
    %197 = vmatprep.subr.bf16.mxu0 %v166
    %198 = vmatpush1.bf16.msra.mxu0 %v165
    %199 = vmatprep.subr.bf16.mxu0 0
    %200 = vmatpush1.bf16.msra.mxu0 0
    %201 = vmatprep.subr.bf16.mxu0 0
    %202 = vmatpush1.bf16.msra.mxu0 0
    %203 = vmatprep.subr.bf16.mxu0 0
    %204 = vmatpush1.bf16.msra.mxu0 0
    %205 = vmatprep.subr.bf16.mxu0 0
    %206 = vmatpush1.bf16.msra.mxu0 0
    %207 = vmatprep.subr.bf16.mxu0 0
    %208 = vmatpush1.bf16.msra.mxu0 0
    %209 = vmatprep.subr.bf16.mxu0 0
    %210 = vmatpush1.bf16.msra.mxu0 0
    %211 = vmatprep.subr.bf16.mxu0 0
    %212 = vmatpush1.bf16.msra.mxu0 0
    %213 = vmatprep.subr.bf16.mxu0 0
    %214 = vmatpush1.bf16.msra.mxu0 0
    %215 = vmatprep.mubr.bf16.mxu0 0
    %216 = vmatmul.mubr.bf16.gmra.mrb[0].mxu0 %v79
    %v217 = vpop.f32.mrb[0].mxu0
    %v218 = vadd.f32 0.0, %v217
    %v219 = vpop.f32.mrb[0].mxu0
    %v220 = vadd.f32 0.0, %v219
    %v221 = vpop.f32.mrb[0].mxu0
    %v222 = vadd.f32 0.0, %v221
    %v223 = vpop.f32.mrb[0].mxu0
    %v224 = vadd.f32 0.0, %v223
    %225 = vmatprep.mubr.bf16.mxu0 0
    %226 = vmatmul.mubr.bf16.gmra.mrb[0].mxu0 %v80
    %v227 = vpop.f32.mrb[0].mxu0
    %v228 = vadd.f32 0.0, %v227
    %v229 = vpop.f32.mrb[0].mxu0
    %v230 = vadd.f32 0.0, %v229
    %v231 = vpop.f32.mrb[0].mxu0
    %v232 = vadd.f32 0.0, %v231
    %v233 = vpop.f32.mrb[0].mxu0
    %v234 = vadd.f32 0.0, %v233
    %235 = vmatprep.mubr.bf16.mxu0 0
    %236 = vmatmul.mubr.bf16.gmra.mrb[0].mxu0 %v81
    %v237 = vpop.f32.mrb[0].mxu0
    %v238 = vadd.f32 0.0, %v237
    %v239 = vpop.f32.mrb[0].mxu0
    %v240 = vadd.f32 0.0, %v239
    %v241 = vpop.f32.mrb[0].mxu0
    %v242 = vadd.f32 0.0, %v241
    %v243 = vpop.f32.mrb[0].mxu0
    %v244 = vadd.f32 0.0, %v243
    %245 = vmatprep.mubr.bf16.mxu0 0
    %246 = vmatmul.mubr.bf16.gmra.mrb[0].mxu0 %v82
    %v247 = vpop.f32.mrb[0].mxu0
    %v248 = vadd.f32 0.0, %v247
    %v249 = vpop.f32.mrb[0].mxu0
    %v250 = vadd.f32 0.0, %v249
    %v251 = vpop.f32.mrb[0].mxu0
    %v252 = vadd.f32 0.0, %v251
    %v253 = vpop.f32.mrb[0].mxu0
    %v254 = vadd.f32 0.0, %v253
    %255 = vmatprep.mubr.bf16.mxu0 0
    %256 = vmatmul.mubr.bf16.gmra.mrb[0].mxu0 %v83
    %v257 = vpop.f32.mrb[0].mxu0
    %v258 = vadd.f32 0.0, %v257
    %v259 = vpop.f32.mrb[0].mxu0
    %v260 = vadd.f32 0.0, %v259
    %v261 = vpop.f32.mrb[0].mxu0
    %v262 = vadd.f32 0.0, %v261
    %v263 = vpop.f32.mrb[0].mxu0
    %v264 = vadd.f32 0.0, %v263
    %265 = vmatprep.mubr.bf16.mxu0 0
    %266 = vmatmul.mubr.bf16.gmra.mrb[0].mxu0 %v84
    %v267 = vpop.f32.mrb[0].mxu0
    %v268 = vadd.f32 0.0, %v267
    %v269 = vpop.f32.mrb[0].mxu0
    %v270 = vadd.f32 0.0, %v269
    %v271 = vpop.f32.mrb[0].mxu0
    %v272 = vadd.f32 0.0, %v271
    %v273 = vpop.f32.mrb[0].mxu0
    %v274 = vadd.f32 0.0, %v273
    %275 = vmatprep.mubr.bf16.mxu0 0
    %276 = vmatmul.mubr.bf16.gmra.mrb[0].mxu0 %v85
    %v277 = vpop.f32.mrb[0].mxu0
    %v278 = vadd.f32 0.0, %v277
    %v279 = vpop.f32.mrb[0].mxu0
    %v280 = vadd.f32 0.0, %v279
    %v281 = vpop.f32.mrb[0].mxu0
    %v282 = vadd.f32 0.0, %v281
    %v283 = vpop.f32.mrb[0].mxu0
    %v284 = vadd.f32 0.0, %v283
    %285 = vmatprep.mubr.bf16.mxu0 0
    %286 = vmatmul.mubr.bf16.gmra.mrb[0].mxu0 %v86
    %v287 = vpop.f32.mrb[0].mxu0
    %v288 = vadd.f32 0.0, %v287
    %v289 = vpop.f32.mrb[0].mxu0
    %v290 = vadd.f32 0.0, %v289
    %v291 = vpop.f32.mrb[0].mxu0
    %v292 = vadd.f32 0.0, %v291
    %v293 = vpop.f32.mrb[0].mxu0
    %v294 = vadd.f32 0.0, %v293
    %295 = vdwg.mxu0
    %v296 = vmax.f32 %v218, 0.0
    %v297 = vmax.f32 %v220, 0.0
    %v298 = vmax.f32 %v222, 0.0
    %v299 = vmax.f32 %v224, 0.0
    %v300 = vmax.f32 %v228, 0.0
    %v301 = vmax.f32 %v230, 0.0
    %v302 = vmax.f32 %v232, 0.0
    %v303 = vmax.f32 %v234, 0.0
    %v304 = vmax.f32 %v238, 0.0
    %v305 = vmax.f32 %v240, 0.0
    %v306 = vmax.f32 %v242, 0.0
    %v307 = vmax.f32 %v244, 0.0
    %v308 = vmax.f32 %v248, 0.0
    %v309 = vmax.f32 %v250, 0.0
    %v310 = vmax.f32 %v252, 0.0
    %v311 = vmax.f32 %v254, 0.0
    %v312 = vmax.f32 %v258, 0.0
    %v313 = vmax.f32 %v260, 0.0
    %v314 = vmax.f32 %v262, 0.0
    %v315 = vmax.f32 %v264, 0.0
    %v316 = vmax.f32 %v268, 0.0
    %v317 = vmax.f32 %v270, 0.0
    %v318 = vmax.f32 %v272, 0.0
    %v319 = vmax.f32 %v274, 0.0
    %v320 = vmax.f32 %v278, 0.0
    %v321 = vmax.f32 %v280, 0.0
    %v322 = vmax.f32 %v282, 0.0
    %v323 = vmax.f32 %v284, 0.0
    %v324 = vmax.f32 %v288, 0.0
    %v325 = vmax.f32 %v290, 0.0
    %v326 = vmax.f32 %v292, 0.0
    %v327 = vmax.f32 %v294, 0.0
    %v328 = vpack.c.bf16 %v298, %v296
    %v329 = vpack.c.bf16 %v299, %v297
    %v330 = vpack.c.bf16 %v302, %v300
    %v331 = vpack.c.bf16 %v303, %v301
    %v332 = vpack.c.bf16 %v306, %v304
    %v333 = vpack.c.bf16 %v307, %v305
    %v334 = vpack.c.bf16 %v310, %v308
    %v335 = vpack.c.bf16 %v311, %v309
    %v336 = vpack.c.bf16 %v314, %v312
    %v337 = vpack.c.bf16 %v315, %v313
    %v338 = vpack.c.bf16 %v318, %v316
    %v339 = vpack.c.bf16 %v319, %v317
    %v340 = vpack.c.bf16 %v322, %v320
    %v341 = vpack.c.bf16 %v323, %v321
    %v342 = vpack.c.bf16 %v326, %v324
    %v343 = vpack.c.bf16 %v327, %v325
    %v344 = vld [vmem:[#allocation7] sm:$0xf]
    %v345 = vld [vmem:[#allocation7 + $0x4] sm:$0xf]
    %v346 = vld [vmem:[#allocation7 + $0x8] sm:$0xf]
    %v347 = vld [vmem:[#allocation7 + $0xc] sm:$0xf]
    %v348 = vld [vmem:[#allocation7 + $0x10] sm:$0xf]
    %v349 = vld [vmem:[#allocation7 + $0x14] sm:$0xf]
    %v350 = vld [vmem:[#allocation7 + $0x18] sm:$0xf]
    %v351 = vld [vmem:[#allocation7 + $0x1c] sm:$0xf]
    %v352 = vld [vmem:[#allocation7 + $0x20] sm:$0xf]
    %v353 = vld [vmem:[#allocation7 + $0x24] sm:$0xf]
    %v354 = vld [vmem:[#allocation7 + $0x28] sm:$0xf]
    %v355 = vld [vmem:[#allocation7 + $0x2c] sm:$0xf]
    %v356 = vld [vmem:[#allocation7 + $0x30] sm:$0xf]
    %v357 = vld [vmem:[#allocation7 + $0x34] sm:$0xf]
    %v358 = vld [vmem:[#allocation7 + $0x38] sm:$0xf]
    %v359 = vld [vmem:[#allocation7 + $0x3c] sm:$0xf]
    %v360 = vld [vmem:[#allocation7 + $0x40] sm:$0xf]
    %v361 = vld [vmem:[#allocation7 + $0x44] sm:$0xf]
    %v362 = vld [vmem:[#allocation7 + $0x48] sm:$0xf]
    %v363 = vld [vmem:[#allocation7 + $0x4c] sm:$0xf]
    %v364 = vld [vmem:[#allocation7 + $0x50] sm:$0xf]
    %v365 = vld [vmem:[#allocation7 + $0x54] sm:$0xf]
    %v366 = vld [vmem:[#allocation7 + $0x58] sm:$0xf]
    %v367 = vld [vmem:[#allocation7 + $0x5c] sm:$0xf]
    %v368 = vld [vmem:[#allocation7 + $0x60] sm:$0xf]
    %v369 = vld [vmem:[#allocation7 + $0x64] sm:$0xf]
    %v370 = vld [vmem:[#allocation7 + $0x68] sm:$0xf]
    %v371 = vld [vmem:[#allocation7 + $0x6c] sm:$0xf]
    %v372 = vld [vmem:[#allocation7 + $0x70] sm:$0xf]
    %v373 = vld [vmem:[#allocation7 + $0x74] sm:$0xf]
    %v374 = vld [vmem:[#allocation7 + $0x78] sm:$0xf]
    %v375 = vld [vmem:[#allocation7 + $0x7c] sm:$0xf]
    %v408 = vunpack.c.l.b16 %v344
    %v409 = vunpack.c.l.b16 %v345
    %v410 = vunpack.c.l.b16 %v346
    %v411 = vunpack.c.l.b16 %v347
    %v412 = vunpack.c.l.b16 %v348
    %v413 = vunpack.c.l.b16 %v349
    %v414 = vunpack.c.l.b16 %v350
    %v415 = vunpack.c.l.b16 %v351
    %v416 = vunpack.c.l.b16 %v352
    %v417 = vunpack.c.l.b16 %v353
    %v418 = vunpack.c.l.b16 %v354
    %v419 = vunpack.c.l.b16 %v355
    %v420 = vunpack.c.l.b16 %v356
    %v421 = vunpack.c.l.b16 %v357
    %v422 = vunpack.c.l.b16 %v358
    %v423 = vunpack.c.l.b16 %v359
    %v424 = vunpack.c.l.b16 %v360
    %v425 = vunpack.c.l.b16 %v361
    %v426 = vunpack.c.l.b16 %v362
    %v427 = vunpack.c.l.b16 %v363
    %v428 = vunpack.c.l.b16 %v364
    %v429 = vunpack.c.l.b16 %v365
    %v430 = vunpack.c.l.b16 %v366
    %v431 = vunpack.c.l.b16 %v367
    %v432 = vunpack.c.l.b16 %v368
    %v433 = vunpack.c.l.b16 %v369
    %v434 = vunpack.c.l.b16 %v370
    %v435 = vunpack.c.l.b16 %v371
    %v436 = vunpack.c.l.b16 %v372
    %v437 = vunpack.c.l.b16 %v373
    %v438 = vunpack.c.l.b16 %v374
    %v439 = vunpack.c.l.b16 %v375
    %v440 = vpack.c.b16 %v409, %v408
    %v441 = vpack.c.b16 %v411, %v410
    %v442 = vpack.c.b16 %v413, %v412
    %v443 = vpack.c.b16 %v415, %v414
    %v444 = vpack.c.b16 %v417, %v416
    %v445 = vpack.c.b16 %v419, %v418
    %v446 = vpack.c.b16 %v421, %v420
    %v447 = vpack.c.b16 %v423, %v422
    %v448 = vpack.c.b16 %v425, %v424
    %v449 = vpack.c.b16 %v427, %v426
    %v450 = vpack.c.b16 %v429, %v428
    %v451 = vpack.c.b16 %v431, %v430
    %v452 = vpack.c.b16 %v433, %v432
    %v453 = vpack.c.b16 %v435, %v434
    %v454 = vpack.c.b16 %v437, %v436
    %v455 = vpack.c.b16 %v439, %v438
    %472 = vmatprep.subr.bf16.mxu0 0
    %473 = vmatpush1.bf16.msra.mxu0 %v440
    %474 = vmatprep.subr.bf16.mxu0 0
    %475 = vmatpush1.bf16.msra.mxu0 %v441
    %476 = vmatprep.subr.bf16.mxu0 0
    %477 = vmatpush1.bf16.msra.mxu0 %v442
    %478 = vmatprep.subr.bf16.mxu0 0
    %479 = vmatpush1.bf16.msra.mxu0 %v443
    %480 = vmatprep.subr.bf16.mxu0 0
    %481 = vmatpush1.bf16.msra.mxu0 %v444
    %482 = vmatprep.subr.bf16.mxu0 0
    %483 = vmatpush1.bf16.msra.mxu0 %v445
    %484 = vmatprep.subr.bf16.mxu0 0
    %485 = vmatpush1.bf16.msra.mxu0 %v446
    %486 = vmatprep.subr.bf16.mxu0 0
    %487 = vmatpush1.bf16.msra.mxu0 %v447
    %488 = vmatprep.subr.bf16.mxu0 0
    %489 = vmatpush1.bf16.msra.mxu0 %v448
    %490 = vmatprep.subr.bf16.mxu0 0
    %491 = vmatpush1.bf16.msra.mxu0 %v449
    %492 = vmatprep.subr.bf16.mxu0 0
    %493 = vmatpush1.bf16.msra.mxu0 %v450
    %494 = vmatprep.subr.bf16.mxu0 0
    %495 = vmatpush1.bf16.msra.mxu0 %v451
    %496 = vmatprep.subr.bf16.mxu0 0
    %497 = vmatpush1.bf16.msra.mxu0 %v452
    %498 = vmatprep.subr.bf16.mxu0 0
    %499 = vmatpush1.bf16.msra.mxu0 %v453
    %500 = vmatprep.subr.bf16.mxu0 0
    %501 = vmatpush1.bf16.msra.mxu0 %v454
    %502 = vmatprep.subr.bf16.mxu0 0
    %503 = vmatpush1.bf16.msra.mxu0 %v455
    %504 = vmatprep.mubr.bf16.mxu0 %v329
    %505 = vmatmul.mubr.bf16.gmra.mrb[0].mxu0 %v328
    %v506 = vpop.f32.mrb[0].mxu0
    %v507 = vadd.f32 %v63, %v506
    %v508 = vpop.f32.mrb[0].mxu0
    %v509 = vpop.f32.mrb[0].mxu0
    %v510 = vadd.f32 %v64, %v509
    %v511 = vpop.f32.mrb[0].mxu0
    %512 = vmatprep.mubr.bf16.mxu0 %v331
    %513 = vmatmul.mubr.bf16.gmra.mrb[0].mxu0 %v330
    %v514 = vpop.f32.mrb[0].mxu0
    %v515 = vadd.f32 %v65, %v514
    %v516 = vpop.f32.mrb[0].mxu0
    %v517 = vpop.f32.mrb[0].mxu0
    %v518 = vadd.f32 %v66, %v517
    %v519 = vpop.f32.mrb[0].mxu0
    %520 = vmatprep.mubr.bf16.mxu0 %v333
    %521 = vmatmul.mubr.bf16.gmra.mrb[0].mxu0 %v332
    %v522 = vpop.f32.mrb[0].mxu0
    %v523 = vadd.f32 %v67, %v522
    %v524 = vpop.f32.mrb[0].mxu0
    %v525 = vpop.f32.mrb[0].mxu0
    %v526 = vadd.f32 %v68, %v525
    %v527 = vpop.f32.mrb[0].mxu0
    %528 = vmatprep.mubr.bf16.mxu0 %v335
    %529 = vmatmul.mubr.bf16.gmra.mrb[0].mxu0 %v334
    %v530 = vpop.f32.mrb[0].mxu0
    %v531 = vadd.f32 %v69, %v530
    %v532 = vpop.f32.mrb[0].mxu0
    %v533 = vpop.f32.mrb[0].mxu0
    %v534 = vadd.f32 %v70, %v533
    %v535 = vpop.f32.mrb[0].mxu0
    %536 = vmatprep.mubr.bf16.mxu0 %v337
    %537 = vmatmul.mubr.bf16.gmra.mrb[0].mxu0 %v336
    %v538 = vpop.f32.mrb[0].mxu0
    %v539 = vadd.f32 %v71, %v538
    %v540 = vpop.f32.mrb[0].mxu0
    %v541 = vpop.f32.mrb[0].mxu0
    %v542 = vadd.f32 %v72, %v541
    %v543 = vpop.f32.mrb[0].mxu0
    %544 = vmatprep.mubr.bf16.mxu0 %v339
    %545 = vmatmul.mubr.bf16.gmra.mrb[0].mxu0 %v338
    %v546 = vpop.f32.mrb[0].mxu0
    %v547 = vadd.f32 %v73, %v546
    %v548 = vpop.f32.mrb[0].mxu0
    %v549 = vpop.f32.mrb[0].mxu0
    %v550 = vadd.f32 %v74, %v549
    %v551 = vpop.f32.mrb[0].mxu0
    %552 = vmatprep.mubr.bf16.mxu0 %v341
    %553 = vmatmul.mubr.bf16.gmra.mrb[0].mxu0 %v340
    %v554 = vpop.f32.mrb[0].mxu0
    %v555 = vadd.f32 %v75, %v554
    %v556 = vpop.f32.mrb[0].mxu0
    %v557 = vpop.f32.mrb[0].mxu0
    %v558 = vadd.f32 %v76, %v557
    %v559 = vpop.f32.mrb[0].mxu0
    %560 = vmatprep.mubr.bf16.mxu0 %v343
    %561 = vmatmul.mubr.bf16.gmra.mrb[0].mxu0 %v342
    %v562 = vpop.f32.mrb[0].mxu0
    %v563 = vadd.f32 %v77, %v562
    %v564 = vpop.f32.mrb[0].mxu0
    %v565 = vpop.f32.mrb[0].mxu0
    %v566 = vadd.f32 %v78, %v565
    %v567 = vpop.f32.mrb[0].mxu0
    %568 = vdwg.mxu0
    %569 = vadd.xlane.f32.xlu0 %v507
    %v570 = vpop.xlane.xlu0 %569
    %571 = vadd.xlane.f32.xlu0 %v510
    %v572 = vpop.xlane.xlu0 %571
    %573 = vadd.xlane.f32.xlu0 %v515
    %v574 = vpop.xlane.xlu0 %573
    %575 = vadd.xlane.f32.xlu0 %v518
    %v576 = vpop.xlane.xlu0 %575
    %577 = vadd.xlane.f32.xlu0 %v523
    %v578 = vpop.xlane.xlu0 %577
    %579 = vadd.xlane.f32.xlu0 %v526
    %v580 = vpop.xlane.xlu0 %579
    %581 = vadd.xlane.f32.xlu0 %v531
    %v582 = vpop.xlane.xlu0 %581
    %583 = vadd.xlane.f32.xlu0 %v534
    %v584 = vpop.xlane.xlu0 %583
    %585 = vadd.xlane.f32.xlu0 %v539
    %v586 = vpop.xlane.xlu0 %585
    %587 = vadd.xlane.f32.xlu0 %v542
    %v588 = vpop.xlane.xlu0 %587
    %589 = vadd.xlane.f32.xlu0 %v547
    %v590 = vpop.xlane.xlu0 %589
    %591 = vadd.xlane.f32.xlu0 %v550
    %v592 = vpop.xlane.xlu0 %591
    %593 = vadd.xlane.f32.xlu0 %v555
    %v594 = vpop.xlane.xlu0 %593
    %595 = vadd.xlane.f32.xlu0 %v558
    %v596 = vpop.xlane.xlu0 %595
    %597 = vadd.xlane.f32.xlu0 %v563
    %v598 = vpop.xlane.xlu0 %597
    %599 = vadd.xlane.f32.xlu0 %v566
    %v600 = vpop.xlane.xlu0 %599
    %v601 = vrcp.pop 128.0
    %v602 = vmul.f32 %v570, %v601
    %v603 = vmul.f32 %v572, %v601
    %v604 = vmul.f32 %v574, %v601
    %v605 = vmul.f32 %v576, %v601
    %v606 = vmul.f32 %v578, %v601
    %v607 = vmul.f32 %v580, %v601
    %v608 = vmul.f32 %v582, %v601
    %v609 = vmul.f32 %v584, %v601
    %v610 = vmul.f32 %v586, %v601
    %v611 = vmul.f32 %v588, %v601
    %v612 = vmul.f32 %v590, %v601
    %v613 = vmul.f32 %v592, %v601
    %v614 = vmul.f32 %v594, %v601
    %v615 = vmul.f32 %v596, %v601
    %v616 = vmul.f32 %v598, %v601
    %v617 = vmul.f32 %v600, %v601
    %v618 = vmul.f32 %v507, %v507
    %v619 = vmul.f32 %v510, %v510
    %v620 = vmul.f32 %v515, %v515
    %v621 = vmul.f32 %v518, %v518
    %v622 = vmul.f32 %v523, %v523
    %v623 = vmul.f32 %v526, %v526
    %v624 = vmul.f32 %v531, %v531
    %v625 = vmul.f32 %v534, %v534
    %v626 = vmul.f32 %v539, %v539
    %v627 = vmul.f32 %v542, %v542
    %v628 = vmul.f32 %v547, %v547
    %v629 = vmul.f32 %v550, %v550
    %v630 = vmul.f32 %v555, %v555
    %v631 = vmul.f32 %v558, %v558
    %v632 = vmul.f32 %v563, %v563
    %v633 = vmul.f32 %v566, %v566
    %634 = vadd.xlane.f32.xlu0 %v618
    %v635 = vpop.xlane.xlu0 %634
    %636 = vadd.xlane.f32.xlu0 %v619
    %v637 = vpop.xlane.xlu0 %636
    %638 = vadd.xlane.f32.xlu0 %v620
    %v639 = vpop.xlane.xlu0 %638
    %640 = vadd.xlane.f32.xlu0 %v621
    %v641 = vpop.xlane.xlu0 %640
    %642 = vadd.xlane.f32.xlu0 %v622
    %v643 = vpop.xlane.xlu0 %642
    %644 = vadd.xlane.f32.xlu0 %v623
    %v645 = vpop.xlane.xlu0 %644
    %646 = vadd.xlane.f32.xlu0 %v624
    %v647 = vpop.xlane.xlu0 %646
    %648 = vadd.xlane.f32.xlu0 %v625
    %v649 = vpop.xlane.xlu0 %648
    %650 = vadd.xlane.f32.xlu0 %v626
    %v651 = vpop.xlane.xlu0 %650
    %652 = vadd.xlane.f32.xlu0 %v627
    %v653 = vpop.xlane.xlu0 %652
    %654 = vadd.xlane.f32.xlu0 %v628
    %v655 = vpop.xlane.xlu0 %654
    %656 = vadd.xlane.f32.xlu0 %v629
    %v657 = vpop.xlane.xlu0 %656
    %658 = vadd.xlane.f32.xlu0 %v630
    %v659 = vpop.xlane.xlu0 %658
    %660 = vadd.xlane.f32.xlu0 %v631
    %v661 = vpop.xlane.xlu0 %660
    %662 = vadd.xlane.f32.xlu0 %v632
    %v663 = vpop.xlane.xlu0 %662
    %664 = vadd.xlane.f32.xlu0 %v633
    %v665 = vpop.xlane.xlu0 %664
    %v666 = vmul.f32 %v635, %v601
    %v667 = vmul.f32 %v637, %v601
    %v668 = vmul.f32 %v639, %v601
    %v669 = vmul.f32 %v641, %v601
    %v670 = vmul.f32 %v643, %v601
    %v671 = vmul.f32 %v645, %v601
    %v672 = vmul.f32 %v647, %v601
    %v673 = vmul.f32 %v649, %v601
    %v674 = vmul.f32 %v651, %v601
    %v675 = vmul.f32 %v653, %v601
    %v676 = vmul.f32 %v655, %v601
    %v677 = vmul.f32 %v657, %v601
    %v678 = vmul.f32 %v659, %v601
    %v679 = vmul.f32 %v661, %v601
    %v680 = vmul.f32 %v663, %v601
    %v681 = vmul.f32 %v665, %v601
    %v682 = vmul.f32 %v602, %v602
    %v683 = vmul.f32 %v603, %v603
    %v684 = vmul.f32 %v604, %v604
    %v685 = vmul.f32 %v605, %v605
    %v686 = vmul.f32 %v606, %v606
    %v687 = vmul.f32 %v607, %v607
    %v688 = vmul.f32 %v608, %v608
    %v689 = vmul.f32 %v609, %v609
    %v690 = vmul.f32 %v610, %v610
    %v691 = vmul.f32 %v611, %v611
    %v692 = vmul.f32 %v612, %v612
    %v693 = vmul.f32 %v613, %v613
    %v694 = vmul.f32 %v614, %v614
    %v695 = vmul.f32 %v615, %v615
    %v696 = vmul.f32 %v616, %v616
    %v697 = vmul.f32 %v617, %v617
    %v698 = vsub.f32 %v666, %v682
    %v699 = vsub.f32 %v667, %v683
    %v700 = vsub.f32 %v668, %v684
    %v701 = vsub.f32 %v669, %v685
    %v702 = vsub.f32 %v670, %v686
    %v703 = vsub.f32 %v671, %v687
    %v704 = vsub.f32 %v672, %v688
    %v705 = vsub.f32 %v673, %v689
    %v706 = vsub.f32 %v674, %v690
    %v707 = vsub.f32 %v675, %v691
    %v708 = vsub.f32 %v676, %v692
    %v709 = vsub.f32 %v677, %v693
    %v710 = vsub.f32 %v678, %v694
    %v711 = vsub.f32 %v679, %v695
    %v712 = vsub.f32 %v680, %v696
    %v713 = vsub.f32 %v681, %v697
    %v714 = vmax.f32 %v698, 0.0
    %v715 = vmax.f32 %v699, 0.0
    %v716 = vmax.f32 %v700, 0.0
    %v717 = vmax.f32 %v701, 0.0
    %v718 = vmax.f32 %v702, 0.0
    %v719 = vmax.f32 %v703, 0.0
    %v720 = vmax.f32 %v704, 0.0
    %v721 = vmax.f32 %v705, 0.0
    %v722 = vmax.f32 %v706, 0.0
    %v723 = vmax.f32 %v707, 0.0
    %v724 = vmax.f32 %v708, 0.0
    %v725 = vmax.f32 %v709, 0.0
    %v726 = vmax.f32 %v710, 0.0
    %v727 = vmax.f32 %v711, 0.0
    %v728 = vmax.f32 %v712, 0.0
    %v729 = vmax.f32 %v713, 0.0
    %v730 = vsub.f32 %v507, %v602
    %v731 = vsub.f32 %v510, %v603
    %v732 = vsub.f32 %v515, %v604
    %v733 = vsub.f32 %v518, %v605
    %v734 = vsub.f32 %v523, %v606
    %v735 = vsub.f32 %v526, %v607
    %v736 = vsub.f32 %v531, %v608
    %v737 = vsub.f32 %v534, %v609
    %v738 = vsub.f32 %v539, %v610
    %v739 = vsub.f32 %v542, %v611
    %v740 = vsub.f32 %v547, %v612
    %v741 = vsub.f32 %v550, %v613
    %v742 = vsub.f32 %v555, %v614
    %v743 = vsub.f32 %v558, %v615
    %v744 = vsub.f32 %v563, %v616
    %v745 = vsub.f32 %v566, %v617
    %v746 = vadd.f32 %v714, 1e-05
    %v747 = vadd.f32 %v715, 1e-05
    %v748 = vadd.f32 %v716, 1e-05
    %v749 = vadd.f32 %v717, 1e-05
    %v750 = vadd.f32 %v718, 1e-05
    %v751 = vadd.f32 %v719, 1e-05
    %v752 = vadd.f32 %v720, 1e-05
    %v753 = vadd.f32 %v721, 1e-05
    %v754 = vadd.f32 %v722, 1e-05
    %v755 = vadd.f32 %v723, 1e-05
    %v756 = vadd.f32 %v724, 1e-05
    %v757 = vadd.f32 %v725, 1e-05
    %v758 = vadd.f32 %v726, 1e-05
    %v759 = vadd.f32 %v727, 1e-05
    %v760 = vadd.f32 %v728, 1e-05
    %v761 = vadd.f32 %v729, 1e-05
    %v762 = vrsqrt.pop %v746
    %v763 = vrsqrt.pop %v747
    %v764 = vrsqrt.pop %v748
    %v765 = vrsqrt.pop %v749
    %v766 = vrsqrt.pop %v750
    %v767 = vrsqrt.pop %v751
    %v768 = vrsqrt.pop %v752
    %v769 = vrsqrt.pop %v753
    %v770 = vrsqrt.pop %v754
    %v771 = vrsqrt.pop %v755
    %v772 = vrsqrt.pop %v756
    %v773 = vrsqrt.pop %v757
    %v774 = vrsqrt.pop %v758
    %v775 = vrsqrt.pop %v759
    %v776 = vrsqrt.pop %v760
    %v777 = vrsqrt.pop %v761
    %v778 = vmul.f32 %v730, %v762
    %v779 = vmul.f32 %v731, %v763
    %v780 = vmul.f32 %v732, %v764
    %v781 = vmul.f32 %v733, %v765
    %v782 = vmul.f32 %v734, %v766
    %v783 = vmul.f32 %v735, %v767
    %v784 = vmul.f32 %v736, %v768
    %v785 = vmul.f32 %v737, %v769
    %v786 = vmul.f32 %v738, %v770
    %v787 = vmul.f32 %v739, %v771
    %v788 = vmul.f32 %v740, %v772
    %v789 = vmul.f32 %v741, %v773
    %v790 = vmul.f32 %v742, %v774
    %v791 = vmul.f32 %v743, %v775
    %v792 = vmul.f32 %v744, %v776
    %v793 = vmul.f32 %v745, %v777
    %v794 = vld [vmem:[%s3] sm:$0x1]
    %v796 = vlaneseq
    %v797 = vshrl.u32 %v796, 7
    %v798 = vsub.s32 0, %v797
    %v799 = vrot.slane %v794, %v798
    %v801 = vmul.f32 %v778, %v799
    %v802 = vmul.f32 %v779, %v799
    %v803 = vmul.f32 %v780, %v799
    %v804 = vmul.f32 %v781, %v799
    %v805 = vmul.f32 %v782, %v799
    %v806 = vmul.f32 %v783, %v799
    %v807 = vmul.f32 %v784, %v799
    %v808 = vmul.f32 %v785, %v799
    %v809 = vmul.f32 %v786, %v799
    %v810 = vmul.f32 %v787, %v799
    %v811 = vmul.f32 %v788, %v799
    %v812 = vmul.f32 %v789, %v799
    %v813 = vmul.f32 %v790, %v799
    %v814 = vmul.f32 %v791, %v799
    %v815 = vmul.f32 %v792, %v799
    %v816 = vmul.f32 %v793, %v799
    %v817 = vld [vmem:[%s4] sm:$0x1]
    %v819 = vlaneseq
    %v820 = vshrl.u32 %v819, 7
    %v821 = vsub.s32 0, %v820
    %v822 = vrot.slane %v817, %v821
    %v824 = vadd.f32 %v801, %v822
    %v825 = vadd.f32 %v802, %v822
    %v826 = vadd.f32 %v803, %v822
    %v827 = vadd.f32 %v804, %v822
    %v828 = vadd.f32 %v805, %v822
    %v829 = vadd.f32 %v806, %v822
    %v830 = vadd.f32 %v807, %v822
    %v831 = vadd.f32 %v808, %v822
    %v832 = vadd.f32 %v809, %v822
    %v833 = vadd.f32 %v810, %v822
    %v834 = vadd.f32 %v811, %v822
    %v835 = vadd.f32 %v812, %v822
    %v836 = vadd.f32 %v813, %v822
    %v837 = vadd.f32 %v814, %v822
    %v838 = vadd.f32 %v815, %v822
    %v839 = vadd.f32 %v816, %v822
    %840 = vst [vmem:[#allocation8] sm:$0xff] %v824
    %841 = vst [vmem:[#allocation8 + $0x8] sm:$0xff] %v825
    %842 = vst [vmem:[#allocation8 + $0x10] sm:$0xff] %v826
    %843 = vst [vmem:[#allocation8 + $0x18] sm:$0xff] %v827
    %844 = vst [vmem:[#allocation8 + $0x20] sm:$0xff] %v828
    %845 = vst [vmem:[#allocation8 + $0x28] sm:$0xff] %v829
    %846 = vst [vmem:[#allocation8 + $0x30] sm:$0xff] %v830
    %847 = vst [vmem:[#allocation8 + $0x38] sm:$0xff] %v831
    %848 = vst [vmem:[#allocation8 + $0x40] sm:$0xff] %v832
    %849 = vst [vmem:[#allocation8 + $0x48] sm:$0xff] %v833
    %850 = vst [vmem:[#allocation8 + $0x50] sm:$0xff] %v834
    %851 = vst [vmem:[#allocation8 + $0x58] sm:$0xff] %v835
    %852 = vst [vmem:[#allocation8 + $0x60] sm:$0xff] %v836
    %853 = vst [vmem:[#allocation8 + $0x68] sm:$0xff] %v837
    %854 = vst [vmem:[#allocation8 + $0x70] sm:$0xff] %v838
    %855 = vst [vmem:[#allocation8 + $0x78] sm:$0xff] %v839
    // Predicated region
    $region34: #{tpu_custom_call.1} parent=1 // pred_check
      _
    $region35: #{tpu_custom_call.1} parent=1 // pred_check_branch
      %857 = sbr.rel (0) target = $region37
    $region36: #{tpu_custom_call.1} parent=1 // pred_region
      %s859 = ssub.s32 2048, 2048
      %860 = vsyncadd [#allocation4], %s859
      %s861 = sshll.u32 [#allocation8], 4
      %s862 = int_to_ptr.vmem [resolvable:$true] %s861
      %867 = dma.vmem_to_hbm [thread:$0]  %s862, 2048, %s5, [#allocation4], 128, 128, 8
    $region37: #{tpu_custom_call.1} parent=1 // pred_fallthru
      _
    // Predicated region
    $region38: #{tpu_custom_call.1} parent=1 // pred_check
      _
    $region39: #{tpu_custom_call.1} parent=1 // pred_check_branch
      %869 = sbr.rel (0) target = $region41
    $region40: #{tpu_custom_call.1} parent=1 // pred_region
      %870 = dma.done [#allocation4], 2048
    $region41: #{tpu_custom_call.1} parent=1 // pred_fallthru
      _
    %871 = vsyncpa [#allocation3], 1
    %872 = vsyncpa [#allocation6], 1
    %873 = vsyncpa [#allocation4], 1

</llo_original>
